<compile_context>
chip_gen: v5e
topology: v5e:2x2
jax: 0.10.0
libtpu: 0.0.40
codegen_flags: <defaults>
</compile_context>

<pallas_src>
import functools

import jax
import jax.numpy as jnp
from jax.experimental import pallas as pl
from jax.experimental.pallas import tpu as pltpu

C_PAD = 128  # classifier output padded to one full lane width


def _lstm_classifier_kernel(x_ref, wih_ref, whh_ref, b_ref, wfc_ref, bfc_ref,
                            o_ref, *, seq_len, batch, hidden):
    """Single-invocation kernel: full LSTM recurrence + classifier head.

    Gate column order (pre-permuted in prepare_params): [i, f, o, g].

    x_ref   : (T*B, In)   bf16, time-major flattened (row t*B + b)
    wih_ref : (In, 4H)    bf16, input->gates weight (pre-transposed, reordered)
    whh_ref : (H, 4H)     bf16, hidden->gates weight (pre-transposed, reordered)
    b_ref   : (1, 4H)     f32, b_ih + b_hh (fused, reordered)
    wfc_ref : (H, C_PAD)  bf16, classifier weight, zero-padded to 128 lanes
    bfc_ref : (1, C_PAD)  f32, classifier bias, zero-padded
    o_ref   : (B, C_PAD)  f32 sigmoid(logits); wrapper slices to (real_B, C)
    """
    T, B, H = seq_len, batch, hidden

    # Hoisted input projection for ALL time steps in one bf16 MXU matmul, with
    # the fused gate bias added once (f32 accumulation / result).
    gx = jnp.dot(x_ref[...], wih_ref[...],
                 preferred_element_type=jnp.float32) + b_ref[...]    # (T*B, 4H) f32
    whh = whh_ref[...]                                               # (H, 4H) bf16

    h = jnp.zeros((B, H), jnp.float32)
    c = jnp.zeros((B, H), jnp.float32)

    # T is small and static -> fully unrolled recurrence; only the bf16
    # h @ W_hh^T sits on the latency-critical dependency chain per step.
    for t in range(T):
        gates = gx[t * B:(t + 1) * B, :] + jnp.dot(
            h.astype(jnp.bfloat16), whh,
            preferred_element_type=jnp.float32)                      # (B, 4H) f32
        # Gate order [i, f, o, g]: one contiguous sigmoid slab + one tanh slab.
        sig = jax.nn.sigmoid(gates[:, :3 * H])
        i_g = sig[:, 0 * H:1 * H]
        f_g = sig[:, 1 * H:2 * H]
        o_g = sig[:, 2 * H:3 * H]
        g_g = jnp.tanh(gates[:, 3 * H:4 * H])
        c = f_g * c + i_g * g_g
        h = o_g * jnp.tanh(c)

    # Classifier head on the last hidden state: ReLU -> Linear -> Sigmoid.
    z = jnp.dot(jnp.maximum(h, 0.0).astype(jnp.bfloat16), wfc_ref[...],
                preferred_element_type=jnp.float32) + bfc_ref[...]   # (B, C_PAD)
    o_ref[...] = jax.nn.sigmoid(z)


def baseline_net_forward(x_btf, params, out_classes=94):
    """x_btf: (B, T, In) float32 (batch_first, like the PyTorch module)."""
    w_ih_t, w_hh_t, b_gates, w_fc_t, b_fc_p = params
    B, T, In = x_btf.shape
    H = w_hh_t.shape[0]
    c_pad = w_fc_t.shape[1]

    # Pad batch up to a multiple of 8 sublanes: tile-aligned per-step slices,
    # full vregs, unmasked full-tile output store.  Padded rows are sliced off.
    B_pad = B + (-B % 8)
    if B_pad != B:
        x_btf = jnp.pad(x_btf, ((0, B_pad - B), (0, 0), (0, 0)))

    # Time-major, flattened so the whole input projection is one matmul;
    # cast to bf16 once here (matmul operands are bf16, accumulation f32).
    x_flat = jnp.transpose(x_btf, (1, 0, 2)).reshape(T * B_pad, In)
    x_flat = x_flat.astype(jnp.bfloat16)

    kernel = functools.partial(_lstm_classifier_kernel,
                               seq_len=T, batch=B_pad, hidden=H)

    vmem_spec = pl.BlockSpec(memory_space=pltpu.MemorySpace.VMEM)
    out_padded = pl.pallas_call(
        kernel,
        out_shape=jax.ShapeDtypeStruct((B_pad, c_pad), jnp.float32),
        in_specs=[vmem_spec] * 6,
        out_specs=vmem_spec,
    )(x_flat, w_ih_t, w_hh_t, b_gates, w_fc_t, b_fc_p)

    return out_padded[:B, :out_classes]


def init_params(key, in_channels, hidden, out_classes):
    """Raw PyTorch-shaped params, U(-1/sqrt(H), 1/sqrt(H)) like nn.LSTM/nn.Linear."""
    k = 1.0 / jnp.sqrt(jnp.float32(hidden))
    keys = jax.random.split(key, 6)
    w_ih = jax.random.uniform(keys[0], (4 * hidden, in_channels), jnp.float32, -k, k)
    w_hh = jax.random.uniform(keys[1], (4 * hidden, hidden), jnp.float32, -k, k)
    b_ih = jax.random.uniform(keys[2], (4 * hidden,), jnp.float32, -k, k)
    b_hh = jax.random.uniform(keys[3], (4 * hidden,), jnp.float32, -k, k)
    w_fc = jax.random.uniform(keys[4], (out_classes, hidden), jnp.float32, -k, k)
    b_fc = jax.random.uniform(keys[5], (out_classes,), jnp.float32, -k, k)
    return (w_ih, w_hh, b_ih, b_hh, w_fc, b_fc)


def _reorder_gate_rows(w):
    """PyTorch row-block order [i, f, g, o] -> kernel order [i, f, o, g]."""
    i_, f_, g_, o_ = jnp.split(w, 4, axis=0)
    return jnp.concatenate([i_, f_, o_, g_], axis=0)


def prepare_params(raw_params, c_pad=C_PAD):
    """Reorder gates / transpose / fuse / pad / cast raw params to kernel layout."""
    w_ih, w_hh, b_ih, b_hh, w_fc, b_fc = raw_params
    hidden = w_hh.shape[1]
    out_classes = w_fc.shape[0]

    w_ih_t = _reorder_gate_rows(w_ih).T.astype(jnp.bfloat16)        # (In, 4H)
    w_hh_t = _reorder_gate_rows(w_hh).T.astype(jnp.bfloat16)        # (H, 4H)
    b_gates = _reorder_gate_rows(
        (b_ih + b_hh).reshape(4 * hidden, 1)).reshape(1, 4 * hidden)  # (1, 4H) f32

    w_fc_t = jnp.zeros((hidden, c_pad), jnp.bfloat16)
    w_fc_t = w_fc_t.at[:, :out_classes].set(w_fc.T.astype(jnp.bfloat16))
    b_fc_p = jnp.zeros((1, c_pad), jnp.float32).at[:, :out_classes].set(b_fc)
    return (w_ih_t, w_hh_t, b_gates.astype(jnp.float32), w_fc_t, b_fc_p)


def reference_forward(x_btf, raw_params):
    """Pure-JAX f32 reference of the PyTorch forward (correctness check)."""
    w_ih, w_hh, b_ih, b_hh, w_fc, b_fc = raw_params
    B, T, _ = x_btf.shape
    H = w_hh.shape[1]
    h = jnp.zeros((B, H), jnp.float32)
    c = jnp.zeros((B, H), jnp.float32)
    for t in range(T):
        gates = x_btf[:, t] @ w_ih.T + h @ w_hh.T + b_ih + b_hh
        i_g = jax.nn.sigmoid(gates[:, 0 * H:1 * H])
        f_g = jax.nn.sigmoid(gates[:, 1 * H:2 * H])
        g_g = jnp.tanh(gates[:, 2 * H:3 * H])
        o_g = jax.nn.sigmoid(gates[:, 3 * H:4 * H])
        c = f_g * c + i_g * g_g
        h = o_g * jnp.tanh(c)
    z = jnp.maximum(h, 0.0) @ w_fc.T + b_fc
    return jax.nn.sigmoid(z)


if __name__ == "__main__":
    B, T, IN_CH = 2, 8, 4
    HIDDEN, OUT_CLASSES = 128, 94   # hidden size fixed to 128 by the module

    key = jax.random.PRNGKey(0)
    kx, kp = jax.random.split(key)
    x = jax.random.normal(kx, (B, T, IN_CH), jnp.float32)  # batch_first like PyTorch

    raw_params = init_params(kp, IN_CH, HIDDEN, OUT_CLASSES)
    params = prepare_params(raw_params)

    out = jax.block_until_ready(baseline_net_forward(x, params, OUT_CLASSES))
    assert out.shape == (B, OUT_CLASSES)
    assert bool(jnp.all((out > 0.0) & (out < 1.0)))

    # f32 reference; kernel uses bf16 matmul operands with f32 accumulation,
    # so allow a slightly looser (but still tight) tolerance.
    ref = jax.block_until_ready(reference_forward(x, raw_params))
    assert jnp.allclose(out, ref, rtol=5e-3, atol=5e-3), \
        float(jnp.max(jnp.abs(out - ref)))

    print("KERNEL_OK")
</pallas_src>

<mosaic_0001>
module attributes {stable_mosaic.version = 11 : i64} {
  func.func @_lstm_classifier_kernel(%arg0: memref<64x4xbf16, #tpu.memory_space<vmem>>, %arg1: memref<4x512xbf16, #tpu.memory_space<vmem>>, %arg2: memref<128x512xbf16, #tpu.memory_space<vmem>>, %arg3: memref<1x512xf32, #tpu.memory_space<vmem>>, %arg4: memref<128x128xbf16, #tpu.memory_space<vmem>>, %arg5: memref<1x128xf32, #tpu.memory_space<vmem>>, %arg6: memref<8x128xf32, #tpu.memory_space<vmem>>) attributes {dimension_semantics = [], scalar_prefetch = 0 : i64, scratch_operands = 0 : i64, tpu.core_type = #tpu.core_type<tc>} {
    %c0 = arith.constant 0 : index
    %c0_0 = arith.constant 0 : index
    %0 = vector.load %arg0[%c0, %c0_0] : memref<64x4xbf16, #tpu.memory_space<vmem>>, vector<64x4xbf16>
    %c0_1 = arith.constant 0 : index
    %c0_2 = arith.constant 0 : index
    %1 = vector.load %arg1[%c0_1, %c0_2] : memref<4x512xbf16, #tpu.memory_space<vmem>>, vector<4x512xbf16>
    %cst = arith.constant dense<0.000000e+00> : vector<64x512xf32>
    %2 = tpu.matmul %0, %1, %cst {dimension_numbers = #tpu.dot_dimension_numbers<[1], [0], [0], [1], [0, 0, 1, 1], [], []>} : vector<64x4xbf16>, vector<4x512xbf16>, vector<64x512xf32> -> vector<64x512xf32>
    %c0_3 = arith.constant 0 : index
    %c0_4 = arith.constant 0 : index
    %3 = vector.load %arg3[%c0_3, %c0_4] : memref<1x512xf32, #tpu.memory_space<vmem>>, vector<1x512xf32>
    %4 = vector.broadcast %3 : vector<1x512xf32> to vector<64x512xf32>
    %5 = arith.addf %2, %4 : vector<64x512xf32>
    %c0_5 = arith.constant 0 : index
    %c0_6 = arith.constant 0 : index
    %6 = vector.load %arg2[%c0_5, %c0_6] : memref<128x512xbf16, #tpu.memory_space<vmem>>, vector<128x512xbf16>
    %cst_7 = arith.constant 0.000000e+00 : f32
    %7 = vector.broadcast %cst_7 : f32 to vector<8x128xf32>
    %cst_8 = arith.constant 0.000000e+00 : f32
    %8 = vector.broadcast %cst_8 : f32 to vector<8x128xf32>
    %9 = vector.extract_strided_slice %5 {offsets = [0, 0], sizes = [8, 512], strides = [1, 1]} : vector<64x512xf32> to vector<8x512xf32>
    %10 = arith.truncf %7 : vector<8x128xf32> to vector<8x128xbf16>
    %cst_9 = arith.constant dense<0.000000e+00> : vector<8x512xf32>
    %11 = tpu.matmul %10, %6, %cst_9 {dimension_numbers = #tpu.dot_dimension_numbers<[1], [0], [0], [1], [0, 0, 1, 1], [], []>} : vector<8x128xbf16>, vector<128x512xbf16>, vector<8x512xf32> -> vector<8x512xf32>
    %12 = arith.addf %9, %11 : vector<8x512xf32>
    %13 = vector.extract_strided_slice %12 {offsets = [0, 0], sizes = [8, 384], strides = [1, 1]} : vector<8x512xf32> to vector<8x384xf32>
    %14 = arith.negf %13 : vector<8x384xf32>
    %15 = math.exp %14 : vector<8x384xf32>
    %cst_10 = arith.constant 1.000000e+00 : f32
    %16 = vector.broadcast %cst_10 : f32 to vector<8x384xf32>
    %17 = arith.addf %16, %15 : vector<8x384xf32>
    %18 = arith.divf %16, %17 : vector<8x384xf32>
    %19 = vector.extract_strided_slice %18 {offsets = [0, 0], sizes = [8, 128], strides = [1, 1]} : vector<8x384xf32> to vector<8x128xf32>
    %20 = vector.extract_strided_slice %18 {offsets = [0, 128], sizes = [8, 128], strides = [1, 1]} : vector<8x384xf32> to vector<8x128xf32>
    %21 = vector.extract_strided_slice %18 {offsets = [0, 256], sizes = [8, 128], strides = [1, 1]} : vector<8x384xf32> to vector<8x128xf32>
    %22 = vector.extract_strided_slice %12 {offsets = [0, 384], sizes = [8, 128], strides = [1, 1]} : vector<8x512xf32> to vector<8x128xf32>
    %23 = math.tanh %22 : vector<8x128xf32>
    %24 = arith.mulf %20, %8 : vector<8x128xf32>
    %25 = arith.mulf %19, %23 : vector<8x128xf32>
    %26 = arith.addf %24, %25 : vector<8x128xf32>
    %27 = math.tanh %26 : vector<8x128xf32>
    %28 = arith.mulf %21, %27 : vector<8x128xf32>
    %29 = vector.extract_strided_slice %5 {offsets = [8, 0], sizes = [8, 512], strides = [1, 1]} : vector<64x512xf32> to vector<8x512xf32>
    %30 = arith.truncf %28 : vector<8x128xf32> to vector<8x128xbf16>
    %cst_11 = arith.constant dense<0.000000e+00> : vector<8x512xf32>
    %31 = tpu.matmul %30, %6, %cst_11 {dimension_numbers = #tpu.dot_dimension_numbers<[1], [0], [0], [1], [0, 0, 1, 1], [], []>} : vector<8x128xbf16>, vector<128x512xbf16>, vector<8x512xf32> -> vector<8x512xf32>
    %32 = arith.addf %29, %31 : vector<8x512xf32>
    %33 = vector.extract_strided_slice %32 {offsets = [0, 0], sizes = [8, 384], strides = [1, 1]} : vector<8x512xf32> to vector<8x384xf32>
    %34 = arith.negf %33 : vector<8x384xf32>
    %35 = math.exp %34 : vector<8x384xf32>
    %cst_12 = arith.constant 1.000000e+00 : f32
    %36 = vector.broadcast %cst_12 : f32 to vector<8x384xf32>
    %37 = arith.addf %36, %35 : vector<8x384xf32>
    %38 = arith.divf %36, %37 : vector<8x384xf32>
    %39 = vector.extract_strided_slice %38 {offsets = [0, 0], sizes = [8, 128], strides = [1, 1]} : vector<8x384xf32> to vector<8x128xf32>
    %40 = vector.extract_strided_slice %38 {offsets = [0, 128], sizes = [8, 128], strides = [1, 1]} : vector<8x384xf32> to vector<8x128xf32>
    %41 = vector.extract_strided_slice %38 {offsets = [0, 256], sizes = [8, 128], strides = [1, 1]} : vector<8x384xf32> to vector<8x128xf32>
    %42 = vector.extract_strided_slice %32 {offsets = [0, 384], sizes = [8, 128], strides = [1, 1]} : vector<8x512xf32> to vector<8x128xf32>
    %43 = math.tanh %42 : vector<8x128xf32>
    %44 = arith.mulf %40, %26 : vector<8x128xf32>
    %45 = arith.mulf %39, %43 : vector<8x128xf32>
    %46 = arith.addf %44, %45 : vector<8x128xf32>
    %47 = math.tanh %46 : vector<8x128xf32>
    %48 = arith.mulf %41, %47 : vector<8x128xf32>
    %49 = vector.extract_strided_slice %5 {offsets = [16, 0], sizes = [8, 512], strides = [1, 1]} : vector<64x512xf32> to vector<8x512xf32>
    %50 = arith.truncf %48 : vector<8x128xf32> to vector<8x128xbf16>
    %cst_13 = arith.constant dense<0.000000e+00> : vector<8x512xf32>
    %51 = tpu.matmul %50, %6, %cst_13 {dimension_numbers = #tpu.dot_dimension_numbers<[1], [0], [0], [1], [0, 0, 1, 1], [], []>} : vector<8x128xbf16>, vector<128x512xbf16>, vector<8x512xf32> -> vector<8x512xf32>
    %52 = arith.addf %49, %51 : vector<8x512xf32>
    %53 = vector.extract_strided_slice %52 {offsets = [0, 0], sizes = [8, 384], strides = [1, 1]} : vector<8x512xf32> to vector<8x384xf32>
    %54 = arith.negf %53 : vector<8x384xf32>
    %55 = math.exp %54 : vector<8x384xf32>
    %cst_14 = arith.constant 1.000000e+00 : f32
    %56 = vector.broadcast %cst_14 : f32 to vector<8x384xf32>
    %57 = arith.addf %56, %55 : vector<8x384xf32>
    %58 = arith.divf %56, %57 : vector<8x384xf32>
    %59 = vector.extract_strided_slice %58 {offsets = [0, 0], sizes = [8, 128], strides = [1, 1]} : vector<8x384xf32> to vector<8x128xf32>
    %60 = vector.extract_strided_slice %58 {offsets = [0, 128], sizes = [8, 128], strides = [1, 1]} : vector<8x384xf32> to vector<8x128xf32>
    %61 = vector.extract_strided_slice %58 {offsets = [0, 256], sizes = [8, 128], strides = [1, 1]} : vector<8x384xf32> to vector<8x128xf32>
    %62 = vector.extract_strided_slice %52 {offsets = [0, 384], sizes = [8, 128], strides = [1, 1]} : vector<8x512xf32> to vector<8x128xf32>
    %63 = math.tanh %62 : vector<8x128xf32>
    %64 = arith.mulf %60, %46 : vector<8x128xf32>
    %65 = arith.mulf %59, %63 : vector<8x128xf32>
    %66 = arith.addf %64, %65 : vector<8x128xf32>
    %67 = math.tanh %66 : vector<8x128xf32>
    %68 = arith.mulf %61, %67 : vector<8x128xf32>
    %69 = vector.extract_strided_slice %5 {offsets = [24, 0], sizes = [8, 512], strides = [1, 1]} : vector<64x512xf32> to vector<8x512xf32>
    %70 = arith.truncf %68 : vector<8x128xf32> to vector<8x128xbf16>
    %cst_15 = arith.constant dense<0.000000e+00> : vector<8x512xf32>
    %71 = tpu.matmul %70, %6, %cst_15 {dimension_numbers = #tpu.dot_dimension_numbers<[1], [0], [0], [1], [0, 0, 1, 1], [], []>} : vector<8x128xbf16>, vector<128x512xbf16>, vector<8x512xf32> -> vector<8x512xf32>
    %72 = arith.addf %69, %71 : vector<8x512xf32>
    %73 = vector.extract_strided_slice %72 {offsets = [0, 0], sizes = [8, 384], strides = [1, 1]} : vector<8x512xf32> to vector<8x384xf32>
    %74 = arith.negf %73 : vector<8x384xf32>
    %75 = math.exp %74 : vector<8x384xf32>
    %cst_16 = arith.constant 1.000000e+00 : f32
    %76 = vector.broadcast %cst_16 : f32 to vector<8x384xf32>
    %77 = arith.addf %76, %75 : vector<8x384xf32>
    %78 = arith.divf %76, %77 : vector<8x384xf32>
    %79 = vector.extract_strided_slice %78 {offsets = [0, 0], sizes = [8, 128], strides = [1, 1]} : vector<8x384xf32> to vector<8x128xf32>
    %80 = vector.extract_strided_slice %78 {offsets = [0, 128], sizes = [8, 128], strides = [1, 1]} : vector<8x384xf32> to vector<8x128xf32>
    %81 = vector.extract_strided_slice %78 {offsets = [0, 256], sizes = [8, 128], strides = [1, 1]} : vector<8x384xf32> to vector<8x128xf32>
    %82 = vector.extract_strided_slice %72 {offsets = [0, 384], sizes = [8, 128], strides = [1, 1]} : vector<8x512xf32> to vector<8x128xf32>
    %83 = math.tanh %82 : vector<8x128xf32>
    %84 = arith.mulf %80, %66 : vector<8x128xf32>
    %85 = arith.mulf %79, %83 : vector<8x128xf32>
    %86 = arith.addf %84, %85 : vector<8x128xf32>
    %87 = math.tanh %86 : vector<8x128xf32>
    %88 = arith.mulf %81, %87 : vector<8x128xf32>
    %89 = vector.extract_strided_slice %5 {offsets = [32, 0], sizes = [8, 512], strides = [1, 1]} : vector<64x512xf32> to vector<8x512xf32>
    %90 = arith.truncf %88 : vector<8x128xf32> to vector<8x128xbf16>
    %cst_17 = arith.constant dense<0.000000e+00> : vector<8x512xf32>
    %91 = tpu.matmul %90, %6, %cst_17 {dimension_numbers = #tpu.dot_dimension_numbers<[1], [0], [0], [1], [0, 0, 1, 1], [], []>} : vector<8x128xbf16>, vector<128x512xbf16>, vector<8x512xf32> -> vector<8x512xf32>
    %92 = arith.addf %89, %91 : vector<8x512xf32>
    %93 = vector.extract_strided_slice %92 {offsets = [0, 0], sizes = [8, 384], strides = [1, 1]} : vector<8x512xf32> to vector<8x384xf32>
    %94 = arith.negf %93 : vector<8x384xf32>
    %95 = math.exp %94 : vector<8x384xf32>
    %cst_18 = arith.constant 1.000000e+00 : f32
    %96 = vector.broadcast %cst_18 : f32 to vector<8x384xf32>
    %97 = arith.addf %96, %95 : vector<8x384xf32>
    %98 = arith.divf %96, %97 : vector<8x384xf32>
    %99 = vector.extract_strided_slice %98 {offsets = [0, 0], sizes = [8, 128], strides = [1, 1]} : vector<8x384xf32> to vector<8x128xf32>
    %100 = vector.extract_strided_slice %98 {offsets = [0, 128], sizes = [8, 128], strides = [1, 1]} : vector<8x384xf32> to vector<8x128xf32>
    %101 = vector.extract_strided_slice %98 {offsets = [0, 256], sizes = [8, 128], strides = [1, 1]} : vector<8x384xf32> to vector<8x128xf32>
    %102 = vector.extract_strided_slice %92 {offsets = [0, 384], sizes = [8, 128], strides = [1, 1]} : vector<8x512xf32> to vector<8x128xf32>
    %103 = math.tanh %102 : vector<8x128xf32>
    %104 = arith.mulf %100, %86 : vector<8x128xf32>
    %105 = arith.mulf %99, %103 : vector<8x128xf32>
    %106 = arith.addf %104, %105 : vector<8x128xf32>
    %107 = math.tanh %106 : vector<8x128xf32>
    %108 = arith.mulf %101, %107 : vector<8x128xf32>
    %109 = vector.extract_strided_slice %5 {offsets = [40, 0], sizes = [8, 512], strides = [1, 1]} : vector<64x512xf32> to vector<8x512xf32>
    %110 = arith.truncf %108 : vector<8x128xf32> to vector<8x128xbf16>
    %cst_19 = arith.constant dense<0.000000e+00> : vector<8x512xf32>
    %111 = tpu.matmul %110, %6, %cst_19 {dimension_numbers = #tpu.dot_dimension_numbers<[1], [0], [0], [1], [0, 0, 1, 1], [], []>} : vector<8x128xbf16>, vector<128x512xbf16>, vector<8x512xf32> -> vector<8x512xf32>
    %112 = arith.addf %109, %111 : vector<8x512xf32>
    %113 = vector.extract_strided_slice %112 {offsets = [0, 0], sizes = [8, 384], strides = [1, 1]} : vector<8x512xf32> to vector<8x384xf32>
    %114 = arith.negf %113 : vector<8x384xf32>
    %115 = math.exp %114 : vector<8x384xf32>
    %cst_20 = arith.constant 1.000000e+00 : f32
    %116 = vector.broadcast %cst_20 : f32 to vector<8x384xf32>
    %117 = arith.addf %116, %115 : vector<8x384xf32>
    %118 = arith.divf %116, %117 : vector<8x384xf32>
    %119 = vector.extract_strided_slice %118 {offsets = [0, 0], sizes = [8, 128], strides = [1, 1]} : vector<8x384xf32> to vector<8x128xf32>
    %120 = vector.extract_strided_slice %118 {offsets = [0, 128], sizes = [8, 128], strides = [1, 1]} : vector<8x384xf32> to vector<8x128xf32>
    %121 = vector.extract_strided_slice %118 {offsets = [0, 256], sizes = [8, 128], strides = [1, 1]} : vector<8x384xf32> to vector<8x128xf32>
    %122 = vector.extract_strided_slice %112 {offsets = [0, 384], sizes = [8, 128], strides = [1, 1]} : vector<8x512xf32> to vector<8x128xf32>
    %123 = math.tanh %122 : vector<8x128xf32>
    %124 = arith.mulf %120, %106 : vector<8x128xf32>
    %125 = arith.mulf %119, %123 : vector<8x128xf32>
    %126 = arith.addf %124, %125 : vector<8x128xf32>
    %127 = math.tanh %126 : vector<8x128xf32>
    %128 = arith.mulf %121, %127 : vector<8x128xf32>
    %129 = vector.extract_strided_slice %5 {offsets = [48, 0], sizes = [8, 512], strides = [1, 1]} : vector<64x512xf32> to vector<8x512xf32>
    %130 = arith.truncf %128 : vector<8x128xf32> to vector<8x128xbf16>
    %cst_21 = arith.constant dense<0.000000e+00> : vector<8x512xf32>
    %131 = tpu.matmul %130, %6, %cst_21 {dimension_numbers = #tpu.dot_dimension_numbers<[1], [0], [0], [1], [0, 0, 1, 1], [], []>} : vector<8x128xbf16>, vector<128x512xbf16>, vector<8x512xf32> -> vector<8x512xf32>
    %132 = arith.addf %129, %131 : vector<8x512xf32>
    %133 = vector.extract_strided_slice %132 {offsets = [0, 0], sizes = [8, 384], strides = [1, 1]} : vector<8x512xf32> to vector<8x384xf32>
    %134 = arith.negf %133 : vector<8x384xf32>
    %135 = math.exp %134 : vector<8x384xf32>
    %cst_22 = arith.constant 1.000000e+00 : f32
    %136 = vector.broadcast %cst_22 : f32 to vector<8x384xf32>
    %137 = arith.addf %136, %135 : vector<8x384xf32>
    %138 = arith.divf %136, %137 : vector<8x384xf32>
    %139 = vector.extract_strided_slice %138 {offsets = [0, 0], sizes = [8, 128], strides = [1, 1]} : vector<8x384xf32> to vector<8x128xf32>
    %140 = vector.extract_strided_slice %138 {offsets = [0, 128], sizes = [8, 128], strides = [1, 1]} : vector<8x384xf32> to vector<8x128xf32>
    %141 = vector.extract_strided_slice %138 {offsets = [0, 256], sizes = [8, 128], strides = [1, 1]} : vector<8x384xf32> to vector<8x128xf32>
    %142 = vector.extract_strided_slice %132 {offsets = [0, 384], sizes = [8, 128], strides = [1, 1]} : vector<8x512xf32> to vector<8x128xf32>
    %143 = math.tanh %142 : vector<8x128xf32>
    %144 = arith.mulf %140, %126 : vector<8x128xf32>
    %145 = arith.mulf %139, %143 : vector<8x128xf32>
    %146 = arith.addf %144, %145 : vector<8x128xf32>
    %147 = math.tanh %146 : vector<8x128xf32>
    %148 = arith.mulf %141, %147 : vector<8x128xf32>
    %149 = vector.extract_strided_slice %5 {offsets = [56, 0], sizes = [8, 512], strides = [1, 1]} : vector<64x512xf32> to vector<8x512xf32>
    %150 = arith.truncf %148 : vector<8x128xf32> to vector<8x128xbf16>
    %cst_23 = arith.constant dense<0.000000e+00> : vector<8x512xf32>
    %151 = tpu.matmul %150, %6, %cst_23 {dimension_numbers = #tpu.dot_dimension_numbers<[1], [0], [0], [1], [0, 0, 1, 1], [], []>} : vector<8x128xbf16>, vector<128x512xbf16>, vector<8x512xf32> -> vector<8x512xf32>
    %152 = arith.addf %149, %151 : vector<8x512xf32>
    %153 = vector.extract_strided_slice %152 {offsets = [0, 0], sizes = [8, 384], strides = [1, 1]} : vector<8x512xf32> to vector<8x384xf32>
    %154 = arith.negf %153 : vector<8x384xf32>
    %155 = math.exp %154 : vector<8x384xf32>
    %cst_24 = arith.constant 1.000000e+00 : f32
    %156 = vector.broadcast %cst_24 : f32 to vector<8x384xf32>
    %157 = arith.addf %156, %155 : vector<8x384xf32>
    %158 = arith.divf %156, %157 : vector<8x384xf32>
    %159 = vector.extract_strided_slice %158 {offsets = [0, 0], sizes = [8, 128], strides = [1, 1]} : vector<8x384xf32> to vector<8x128xf32>
    %160 = vector.extract_strided_slice %158 {offsets = [0, 128], sizes = [8, 128], strides = [1, 1]} : vector<8x384xf32> to vector<8x128xf32>
    %161 = vector.extract_strided_slice %158 {offsets = [0, 256], sizes = [8, 128], strides = [1, 1]} : vector<8x384xf32> to vector<8x128xf32>
    %162 = vector.extract_strided_slice %152 {offsets = [0, 384], sizes = [8, 128], strides = [1, 1]} : vector<8x512xf32> to vector<8x128xf32>
    %163 = math.tanh %162 : vector<8x128xf32>
    %164 = arith.mulf %160, %146 : vector<8x128xf32>
    %165 = arith.mulf %159, %163 : vector<8x128xf32>
    %166 = arith.addf %164, %165 : vector<8x128xf32>
    %167 = math.tanh %166 : vector<8x128xf32>
    %168 = arith.mulf %161, %167 : vector<8x128xf32>
    %cst_25 = arith.constant 0.000000e+00 : f32
    %169 = vector.broadcast %cst_25 : f32 to vector<8x128xf32>
    %170 = arith.maximumf %168, %169 : vector<8x128xf32>
    %171 = arith.truncf %170 : vector<8x128xf32> to vector<8x128xbf16>
    %c0_26 = arith.constant 0 : index
    %c0_27 = arith.constant 0 : index
    %172 = vector.load %arg4[%c0_26, %c0_27] : memref<128x128xbf16, #tpu.memory_space<vmem>>, vector<128x128xbf16>
    %cst_28 = arith.constant dense<0.000000e+00> : vector<8x128xf32>
    %173 = tpu.matmul %171, %172, %cst_28 {dimension_numbers = #tpu.dot_dimension_numbers<[1], [0], [0], [1], [0, 0, 1, 1], [], []>} : vector<8x128xbf16>, vector<128x128xbf16>, vector<8x128xf32> -> vector<8x128xf32>
    %c0_29 = arith.constant 0 : index
    %c0_30 = arith.constant 0 : index
    %174 = vector.load %arg5[%c0_29, %c0_30] : memref<1x128xf32, #tpu.memory_space<vmem>>, vector<1x128xf32>
    %175 = vector.broadcast %174 : vector<1x128xf32> to vector<8x128xf32>
    %176 = arith.addf %173, %175 : vector<8x128xf32>
    %177 = arith.negf %176 : vector<8x128xf32>
    %178 = math.exp %177 : vector<8x128xf32>
    %cst_31 = arith.constant 1.000000e+00 : f32
    %179 = vector.broadcast %cst_31 : f32 to vector<8x128xf32>
    %180 = arith.addf %179, %178 : vector<8x128xf32>
    %181 = arith.divf %179, %180 : vector<8x128xf32>
    %c0_32 = arith.constant 0 : index
    %c0_33 = arith.constant 0 : index
    %182 = vector.load %arg6[%c0_32, %c0_33] : memref<8x128xf32, #tpu.memory_space<vmem>>, vector<8x128xf32>
    tpu.vector_store %arg6[%c0_32, %c0_33], %181 {strides = array<i32>} : memref<8x128xf32, #tpu.memory_space<vmem>>, vector<8x128xf32>,
    return
  }
}

</mosaic_0001>

<llo_original>
// kernel: tpu_custom_call.1
$region0: #{tpu_custom_call.1}
  #allocation0 [shape = 'u32[]', space=smem, size = 0x4, offset = 0x4, fixed_abs, tag = 'smem constant byte address 0x4 - core index']
  #allocation1 [shape = 'u32[72,128]{1,0:T(1,128)}', space=vmem, size = 0x9000, scoped, tag = 'internal scratch']
  %s0 = inlined_call_operand.vmem [shape: bf16[64,4], index: 0, kind: input, shape index: {}]
  %s1 = inlined_call_operand.vmem [shape: bf16[4,512], index: 1, kind: input, shape index: {}]
  %s2 = inlined_call_operand.hbm [shape: bf16[128,512], index: 2, kind: input, shape index: {}]
  %s3 = inlined_call_operand.vmem [shape: f32[1,512], index: 3, kind: input, shape index: {}]
  %s4 = inlined_call_operand.hbm [shape: bf16[128,128], index: 4, kind: input, shape index: {}]
  %s5 = inlined_call_operand.vmem [shape: f32[1,128], index: 5, kind: input, shape index: {}]
  %s6 = inlined_call_operand.hbm [shape: f32[8,128], index: 6, kind: output, shape index: {}]
  %s7 = sld [smem:[#allocation0]]
  $region42: #{tpu_custom_call.1} parent=0
    _
  %s9 = ssub.s32 1, %s7
  %s10 = scalar_select 0, %s9, %s7
  $region1: #{tpu_custom_call.1} parent=0
    #allocation2 [shape = 'u8[131072]{0}', space=vmem, size = 0x20000, scoped, tag = 'input window, operand 2, single buffered']
    #allocation3 [shape = 's32[1]{0}', space=sflag, size = 0x4, scoped, tag = 'scoped memory for tpu_custom_call.1']
    #allocation4 [shape = 's32[1]{0}', space=sflag, size = 0x4, scoped, tag = 'scoped memory for tpu_custom_call.1']
    #allocation5 [shape = 'u8[32768]{0}', space=vmem, size = 0x8000, scoped, tag = 'input window, operand 4, single buffered']
    #allocation6 [shape = 's32[1]{0}', space=sflag, size = 0x4, scoped, tag = 'scoped memory for tpu_custom_call.1']
    #allocation7 [shape = 'u8[4096]{0}', space=vmem, size = 0x1000, scoped, tag = 'output window, operand 0, single buffered']
    %11 = vsyncpa [#allocation3], 0
    %12 = vsyncpa [#allocation6], 0
    %13 = vsyncpa [#allocation4], 0
    // Predicated region
    $region2: #{tpu_custom_call.1} parent=1 // pred_check
      _
    $region3: #{tpu_custom_call.1} parent=1 // pred_check_branch
      %15 = sbr.rel (0) target = $region5
    $region4: #{tpu_custom_call.1} parent=1 // pred_region
      _
    $region5: #{tpu_custom_call.1} parent=1 // pred_fallthru
      _
    // Predicated region
    $region6: #{tpu_custom_call.1} parent=1 // pred_check
      _
    $region7: #{tpu_custom_call.1} parent=1 // pred_check_branch
      %17 = sbr.rel (0) target = $region9
    $region8: #{tpu_custom_call.1} parent=1 // pred_region
      _
    $region9: #{tpu_custom_call.1} parent=1 // pred_fallthru
      _
    // Predicated region
    $region10: #{tpu_custom_call.1} parent=1 // pred_check
      _
    $region11: #{tpu_custom_call.1} parent=1 // pred_check_branch
      %19 = sbr.rel (0) target = $region13
    $region12: #{tpu_custom_call.1} parent=1 // pred_region
      %21 = vsyncadd [#allocation3], 0
      %s22 = sshll.u32 %s2, 4
      %s23 = int_to_ptr.hbm [resolvable:$true] %s22
      %s24 = sshll.u32 [#allocation2], 4
      %s25 = int_to_ptr.vmem [resolvable:$true] %s24
      %30 = dma.hbm_to_vmem [thread:$0]  %s23, 4096, %s25, [#allocation3], 256, 256, 16
    $region13: #{tpu_custom_call.1} parent=1 // pred_fallthru
      _
    // Predicated region
    $region14: #{tpu_custom_call.1} parent=1 // pred_check
      _
    $region15: #{tpu_custom_call.1} parent=1 // pred_check_branch
      %32 = sbr.rel (0) target = $region17
    $region16: #{tpu_custom_call.1} parent=1 // pred_region
      _
    $region17: #{tpu_custom_call.1} parent=1 // pred_fallthru
      _
    // Predicated region
    $region18: #{tpu_custom_call.1} parent=1 // pred_check
      _
    $region19: #{tpu_custom_call.1} parent=1 // pred_check_branch
      %34 = sbr.rel (0) target = $region21
    $region20: #{tpu_custom_call.1} parent=1 // pred_region
      %36 = vsyncadd [#allocation6], 0
      %s37 = sshll.u32 %s4, 4
      %s38 = int_to_ptr.hbm [resolvable:$true] %s37
      %s39 = sshll.u32 [#allocation5], 4
      %s40 = int_to_ptr.vmem [resolvable:$true] %s39
      %45 = dma.hbm_to_vmem [thread:$0]  %s38, 1024, %s40, [#allocation6], 64, 64, 4
    $region21: #{tpu_custom_call.1} parent=1 // pred_fallthru
      _
    // Predicated region
    $region22: #{tpu_custom_call.1} parent=1 // pred_check
      _
    $region23: #{tpu_custom_call.1} parent=1 // pred_check_branch
      %47 = sbr.rel (0) target = $region25
    $region24: #{tpu_custom_call.1} parent=1 // pred_region
      _
    $region25: #{tpu_custom_call.1} parent=1 // pred_fallthru
      _
    // Predicated region
    $region26: #{tpu_custom_call.1} parent=1 // pred_check
      _
    $region27: #{tpu_custom_call.1} parent=1 // pred_check_branch
      %49 = sbr.rel (0) target = $region29
    $region28: #{tpu_custom_call.1} parent=1 // pred_region
      %51 = dma.done [#allocation3], 4096
    $region29: #{tpu_custom_call.1} parent=1 // pred_fallthru
      _
    // Predicated region
    $region30: #{tpu_custom_call.1} parent=1 // pred_check
      _
    $region31: #{tpu_custom_call.1} parent=1 // pred_check_branch
      %53 = sbr.rel (0) target = $region33
    $region32: #{tpu_custom_call.1} parent=1 // pred_region
      %55 = dma.done [#allocation6], 1024
    $region33: #{tpu_custom_call.1} parent=1 // pred_fallthru
      _
    %v57 = vld [vmem:[%s0] sm:$0xf]
    %v58 = vld [vmem:[%s0 + $0x4] sm:$0xf]
    %v59 = vld [vmem:[%s0 + $0x8] sm:$0xf]
    %v60 = vld [vmem:[%s0 + $0xc] sm:$0xf]
    %v61 = vld [vmem:[%s0 + $0x10] sm:$0xf]
    %v62 = vld [vmem:[%s0 + $0x14] sm:$0xf]
    %v63 = vld [vmem:[%s0 + $0x18] sm:$0xf]
    %v64 = vld [vmem:[%s0 + $0x1c] sm:$0xf]
    %v65 = vld [vmem:[%s1] sm:$0xff]
    %v66 = vld [vmem:[%s3] sm:$0xf]
    %v68 = vperm.slane %v66, 0
    %v69 = vperm.slane %v66, 1
    %v70 = vperm.slane %v66, 2
    %v71 = vperm.slane %v66, 3
    %v84 = vunpack.c.l.b16 %v57
    %v85 = vunpack.c.l.b16 %v58
    %v86 = vunpack.c.l.b16 %v59
    %v87 = vunpack.c.l.b16 %v60
    %v88 = vunpack.c.l.b16 %v61
    %v89 = vunpack.c.l.b16 %v62
    %v90 = vunpack.c.l.b16 %v63
    %v91 = vunpack.c.l.b16 %v64
    %v92 = vpack.c.b16 %v85, %v84
    %v93 = vpack.c.b16 %v87, %v86
    %v94 = vpack.c.b16 %v89, %v88
    %v95 = vpack.c.b16 %v91, %v90
    %97 = vst [vmem:[#allocation1] ss:$4 sm:$0xff] %v65
    %v98 = vld.sshfl [vmem:[#allocation1] sm:$0xff pattern:$0x73625140]
    %v99 = vld.sshfl [vmem:[#allocation1 + $0x8] sm:$0xff pattern:$0x73625140]
    %v100 = vld.sshfl [vmem:[#allocation1 + $0x10] sm:$0xff pattern:$0x73625140]
    %v101 = vld.sshfl [vmem:[#allocation1 + $0x18] sm:$0xff pattern:$0x73625140]
    %vm102 = vcmask 31744
    %v104 = vsel %vm102, %v92, 0
    %v107 = vsel %vm102, %v93, 0
    %v110 = vsel %vm102, %v94, 0
    %v113 = vsel %vm102, %v95, 0
    %vm115 = vcmask 1041408
    %v116 = vsel %vm115, %v98, 0
    %v118 = vsel %vm115, %v99, 0
    %v120 = vsel %vm115, %v100, 0
    %v122 = vsel %vm115, %v101, 0
    %124 = vmatpush.bf16.msra.mxu0 0
    %125 = vmatpush.bf16.msra.mxu0 0
    %126 = vmatpush.bf16.msra.mxu0 0
    %127 = vmatpush.bf16.msra.mxu0 0
    %128 = vmatpush.bf16.msra.mxu0 0
    %129 = vmatpush.bf16.msra.mxu0 0
    %130 = vmatpush.bf16.msra.mxu0 0
    %131 = vmatpush.bf16.msra.mxu0 %v116
    %132 = vmatmul.bf16.gmra.mxu0 %v104
    %v133 = vpop.f32.mrf.mxu0
    %v134 = vadd.f32 %v68, %v133
    %v135 = vpop.f32.mrf.mxu0
    %v136 = vadd.f32 %v68, %v135
    %137 = vmatmul.bf16.gmra.mxu0 %v107
    %v138 = vpop.f32.mrf.mxu0
    %v139 = vadd.f32 %v68, %v138
    %v140 = vpop.f32.mrf.mxu0
    %v141 = vadd.f32 %v68, %v140
    %142 = vmatmul.bf16.gmra.mxu0 %v110
    %v143 = vpop.f32.mrf.mxu0
    %v144 = vadd.f32 %v68, %v143
    %v145 = vpop.f32.mrf.mxu0
    %v146 = vadd.f32 %v68, %v145
    %147 = vmatmul.bf16.gmra.mxu0 %v113
    %v148 = vpop.f32.mrf.mxu0
    %v149 = vadd.f32 %v68, %v148
    %v150 = vpop.f32.mrf.mxu0
    %v151 = vadd.f32 %v68, %v150
    %152 = vdwg.mxu0
    %153 = vmatpush.bf16.msra.mxu0 0
    %154 = vmatpush.bf16.msra.mxu0 0
    %155 = vmatpush.bf16.msra.mxu0 0
    %156 = vmatpush.bf16.msra.mxu0 0
    %157 = vmatpush.bf16.msra.mxu0 0
    %158 = vmatpush.bf16.msra.mxu0 0
    %159 = vmatpush.bf16.msra.mxu0 0
    %160 = vmatpush.bf16.msra.mxu0 %v118
    %161 = vmatmul.bf16.gmra.mxu0 %v104
    %v162 = vpop.f32.mrf.mxu0
    %v163 = vadd.f32 %v69, %v162
    %v164 = vpop.f32.mrf.mxu0
    %v165 = vadd.f32 %v69, %v164
    %166 = vmatmul.bf16.gmra.mxu0 %v107
    %v167 = vpop.f32.mrf.mxu0
    %v168 = vadd.f32 %v69, %v167
    %v169 = vpop.f32.mrf.mxu0
    %v170 = vadd.f32 %v69, %v169
    %171 = vmatmul.bf16.gmra.mxu0 %v110
    %v172 = vpop.f32.mrf.mxu0
    %v173 = vadd.f32 %v69, %v172
    %v174 = vpop.f32.mrf.mxu0
    %v175 = vadd.f32 %v69, %v174
    %176 = vmatmul.bf16.gmra.mxu0 %v113
    %v177 = vpop.f32.mrf.mxu0
    %v178 = vadd.f32 %v69, %v177
    %v179 = vpop.f32.mrf.mxu0
    %v180 = vadd.f32 %v69, %v179
    %181 = vdwg.mxu0
    %182 = vmatpush.bf16.msra.mxu0 0
    %183 = vmatpush.bf16.msra.mxu0 0
    %184 = vmatpush.bf16.msra.mxu0 0
    %185 = vmatpush.bf16.msra.mxu0 0
    %186 = vmatpush.bf16.msra.mxu0 0
    %187 = vmatpush.bf16.msra.mxu0 0
    %188 = vmatpush.bf16.msra.mxu0 0
    %189 = vmatpush.bf16.msra.mxu0 %v120
    %190 = vmatmul.bf16.gmra.mxu0 %v104
    %v191 = vpop.f32.mrf.mxu0
    %v192 = vadd.f32 %v70, %v191
    %v193 = vpop.f32.mrf.mxu0
    %v194 = vadd.f32 %v70, %v193
    %195 = vmatmul.bf16.gmra.mxu0 %v107
    %v196 = vpop.f32.mrf.mxu0
    %v197 = vadd.f32 %v70, %v196
    %v198 = vpop.f32.mrf.mxu0
    %v199 = vadd.f32 %v70, %v198
    %200 = vmatmul.bf16.gmra.mxu0 %v110
    %v201 = vpop.f32.mrf.mxu0
    %v202 = vadd.f32 %v70, %v201
    %v203 = vpop.f32.mrf.mxu0
    %v204 = vadd.f32 %v70, %v203
    %205 = vmatmul.bf16.gmra.mxu0 %v113
    %v206 = vpop.f32.mrf.mxu0
    %v207 = vadd.f32 %v70, %v206
    %v208 = vpop.f32.mrf.mxu0
    %v209 = vadd.f32 %v70, %v208
    %210 = vdwg.mxu0
    %211 = vmatpush.bf16.msra.mxu0 0
    %212 = vmatpush.bf16.msra.mxu0 0
    %213 = vmatpush.bf16.msra.mxu0 0
    %214 = vmatpush.bf16.msra.mxu0 0
    %215 = vmatpush.bf16.msra.mxu0 0
    %216 = vmatpush.bf16.msra.mxu0 0
    %217 = vmatpush.bf16.msra.mxu0 0
    %218 = vmatpush.bf16.msra.mxu0 %v122
    %219 = vmatmul.bf16.gmra.mxu0 %v104
    %v220 = vpop.f32.mrf.mxu0
    %v221 = vadd.f32 %v71, %v220
    %v222 = vpop.f32.mrf.mxu0
    %v223 = vadd.f32 %v71, %v222
    %224 = vmatmul.bf16.gmra.mxu0 %v107
    %v225 = vpop.f32.mrf.mxu0
    %v226 = vadd.f32 %v71, %v225
    %v227 = vpop.f32.mrf.mxu0
    %v228 = vadd.f32 %v71, %v227
    %229 = vmatmul.bf16.gmra.mxu0 %v110
    %v230 = vpop.f32.mrf.mxu0
    %v231 = vadd.f32 %v71, %v230
    %v232 = vpop.f32.mrf.mxu0
    %v233 = vadd.f32 %v71, %v232
    %234 = vmatmul.bf16.gmra.mxu0 %v113
    %v235 = vpop.f32.mrf.mxu0
    %v236 = vadd.f32 %v71, %v235
    %v237 = vpop.f32.mrf.mxu0
    %v238 = vadd.f32 %v71, %v237
    %239 = vdwg.mxu0
    %v240 = vld [vmem:[#allocation2] sm:$0xff]
    %v241 = vld [vmem:[#allocation2 + $0x8] sm:$0xff]
    %v242 = vld [vmem:[#allocation2 + $0x10] sm:$0xff]
    %v243 = vld [vmem:[#allocation2 + $0x18] sm:$0xff]
    %v244 = vld [vmem:[#allocation2 + $0x20] sm:$0xff]
    %v245 = vld [vmem:[#allocation2 + $0x28] sm:$0xff]
    %v246 = vld [vmem:[#allocation2 + $0x30] sm:$0xff]
    %v247 = vld [vmem:[#allocation2 + $0x38] sm:$0xff]
    %v248 = vld [vmem:[#allocation2 + $0x40] sm:$0xff]
    %v249 = vld [vmem:[#allocation2 + $0x48] sm:$0xff]
    %v250 = vld [vmem:[#allocation2 + $0x50] sm:$0xff]
    %v251 = vld [vmem:[#allocation2 + $0x58] sm:$0xff]
    %v252 = vld [vmem:[#allocation2 + $0x60] sm:$0xff]
    %v253 = vld [vmem:[#allocation2 + $0x68] sm:$0xff]
    %v254 = vld [vmem:[#allocation2 + $0x70] sm:$0xff]
    %v255 = vld [vmem:[#allocation2 + $0x78] sm:$0xff]
    %v256 = vld [vmem:[#allocation2 + $0x80] sm:$0xff]
    %v257 = vld [vmem:[#allocation2 + $0x88] sm:$0xff]
    %v258 = vld [vmem:[#allocation2 + $0x90] sm:$0xff]
    %v259 = vld [vmem:[#allocation2 + $0x98] sm:$0xff]
    %v260 = vld [vmem:[#allocation2 + $0xa0] sm:$0xff]
    %v261 = vld [vmem:[#allocation2 + $0xa8] sm:$0xff]
    %v262 = vld [vmem:[#allocation2 + $0xb0] sm:$0xff]
    %v263 = vld [vmem:[#allocation2 + $0xb8] sm:$0xff]
    %v264 = vld [vmem:[#allocation2 + $0xc0] sm:$0xff]
    %v265 = vld [vmem:[#allocation2 + $0xc8] sm:$0xff]
    %v266 = vld [vmem:[#allocation2 + $0xd0] sm:$0xff]
    %v267 = vld [vmem:[#allocation2 + $0xd8] sm:$0xff]
    %v268 = vld [vmem:[#allocation2 + $0xe0] sm:$0xff]
    %v269 = vld [vmem:[#allocation2 + $0xe8] sm:$0xff]
    %v270 = vld [vmem:[#allocation2 + $0xf0] sm:$0xff]
    %v271 = vld [vmem:[#allocation2 + $0xf8] sm:$0xff]
    %v304 = vunpack.c.l.b16 %v240
    %v305 = vunpack.c.h.b16 %v240
    %v306 = vunpack.c.l.b16 %v241
    %v307 = vunpack.c.h.b16 %v241
    %v308 = vunpack.c.l.b16 %v242
    %v309 = vunpack.c.h.b16 %v242
    %v310 = vunpack.c.l.b16 %v243
    %v311 = vunpack.c.h.b16 %v243
    %v312 = vunpack.c.l.b16 %v244
    %v313 = vunpack.c.h.b16 %v244
    %v314 = vunpack.c.l.b16 %v245
    %v315 = vunpack.c.h.b16 %v245
    %v316 = vunpack.c.l.b16 %v246
    %v317 = vunpack.c.h.b16 %v246
    %v318 = vunpack.c.l.b16 %v247
    %v319 = vunpack.c.h.b16 %v247
    %v320 = vunpack.c.l.b16 %v248
    %v321 = vunpack.c.h.b16 %v248
    %v322 = vunpack.c.l.b16 %v249
    %v323 = vunpack.c.h.b16 %v249
    %v324 = vunpack.c.l.b16 %v250
    %v325 = vunpack.c.h.b16 %v250
    %v326 = vunpack.c.l.b16 %v251
    %v327 = vunpack.c.h.b16 %v251
    %v328 = vunpack.c.l.b16 %v252
    %v329 = vunpack.c.h.b16 %v252
    %v330 = vunpack.c.l.b16 %v253
    %v331 = vunpack.c.h.b16 %v253
    %v332 = vunpack.c.l.b16 %v254
    %v333 = vunpack.c.h.b16 %v254
    %v334 = vunpack.c.l.b16 %v255
    %v335 = vunpack.c.h.b16 %v255
    %v336 = vunpack.c.l.b16 %v256
    %v337 = vunpack.c.h.b16 %v256
    %v338 = vunpack.c.l.b16 %v257
    %v339 = vunpack.c.h.b16 %v257
    %v340 = vunpack.c.l.b16 %v258
    %v341 = vunpack.c.h.b16 %v258
    %v342 = vunpack.c.l.b16 %v259
    %v343 = vunpack.c.h.b16 %v259
    %v344 = vunpack.c.l.b16 %v260
    %v345 = vunpack.c.h.b16 %v260
    %v346 = vunpack.c.l.b16 %v261
    %v347 = vunpack.c.h.b16 %v261
    %v348 = vunpack.c.l.b16 %v262
    %v349 = vunpack.c.h.b16 %v262
    %v350 = vunpack.c.l.b16 %v263
    %v351 = vunpack.c.h.b16 %v263
    %v352 = vunpack.c.l.b16 %v264
    %v353 = vunpack.c.h.b16 %v264
    %v354 = vunpack.c.l.b16 %v265
    %v355 = vunpack.c.h.b16 %v265
    %v356 = vunpack.c.l.b16 %v266
    %v357 = vunpack.c.h.b16 %v266
    %v358 = vunpack.c.l.b16 %v267
    %v359 = vunpack.c.h.b16 %v267
    %v360 = vunpack.c.l.b16 %v268
    %v361 = vunpack.c.h.b16 %v268
    %v362 = vunpack.c.l.b16 %v269
    %v363 = vunpack.c.h.b16 %v269
    %v364 = vunpack.c.l.b16 %v270
    %v365 = vunpack.c.h.b16 %v270
    %v366 = vunpack.c.l.b16 %v271
    %v367 = vunpack.c.h.b16 %v271
    %v368 = vpack.c.b16 %v308, %v304
    %v369 = vpack.c.b16 %v309, %v305
    %v370 = vpack.c.b16 %v310, %v306
    %v371 = vpack.c.b16 %v311, %v307
    %v372 = vpack.c.b16 %v316, %v312
    %v373 = vpack.c.b16 %v317, %v313
    %v374 = vpack.c.b16 %v318, %v314
    %v375 = vpack.c.b16 %v319, %v315
    %v376 = vpack.c.b16 %v324, %v320
    %v377 = vpack.c.b16 %v325, %v321
    %v378 = vpack.c.b16 %v326, %v322
    %v379 = vpack.c.b16 %v327, %v323
    %v380 = vpack.c.b16 %v332, %v328
    %v381 = vpack.c.b16 %v333, %v329
    %v382 = vpack.c.b16 %v334, %v330
    %v383 = vpack.c.b16 %v335, %v331
    %v384 = vpack.c.b16 %v340, %v336
    %v385 = vpack.c.b16 %v341, %v337
    %v386 = vpack.c.b16 %v342, %v338
    %v387 = vpack.c.b16 %v343, %v339
    %v388 = vpack.c.b16 %v348, %v344
    %v389 = vpack.c.b16 %v349, %v345
    %v390 = vpack.c.b16 %v350, %v346
    %v391 = vpack.c.b16 %v351, %v347
    %v392 = vpack.c.b16 %v356, %v352
    %v393 = vpack.c.b16 %v357, %v353
    %v394 = vpack.c.b16 %v358, %v354
    %v395 = vpack.c.b16 %v359, %v355
    %v396 = vpack.c.b16 %v364, %v360
    %v397 = vpack.c.b16 %v365, %v361
    %v398 = vpack.c.b16 %v366, %v362
    %v399 = vpack.c.b16 %v367, %v363
    %432 = vmatpush.bf16.msra.mxu0 %v396
    %433 = vmatpush.bf16.msra.mxu0 %v392
    %434 = vmatpush.bf16.msra.mxu0 %v388
    %435 = vmatpush.bf16.msra.mxu0 %v384
    %436 = vmatpush.bf16.msra.mxu0 %v380
    %437 = vmatpush.bf16.msra.mxu0 %v376
    %438 = vmatpush.bf16.msra.mxu0 %v372
    %439 = vmatpush.bf16.msra.mxu0 %v368
    %440 = vmatmul.bf16.gmra.mxu0 0
    %v441 = vpop.f32.mrf.mxu0
    %v442 = vadd.f32 0.0, %v441
    %v443 = vpop.f32.mrf.mxu0
    %444 = vdwg.mxu0
    %445 = vmatpush.bf16.msra.mxu0 %v397
    %446 = vmatpush.bf16.msra.mxu0 %v393
    %447 = vmatpush.bf16.msra.mxu0 %v389
    %448 = vmatpush.bf16.msra.mxu0 %v385
    %449 = vmatpush.bf16.msra.mxu0 %v381
    %450 = vmatpush.bf16.msra.mxu0 %v377
    %451 = vmatpush.bf16.msra.mxu0 %v373
    %452 = vmatpush.bf16.msra.mxu0 %v369
    %453 = vmatmul.bf16.gmra.mxu0 0
    %v454 = vpop.f32.mrf.mxu0
    %v455 = vadd.f32 0.0, %v454
    %v456 = vpop.f32.mrf.mxu0
    %457 = vdwg.mxu0
    %458 = vmatpush.bf16.msra.mxu0 %v398
    %459 = vmatpush.bf16.msra.mxu0 %v394
    %460 = vmatpush.bf16.msra.mxu0 %v390
    %461 = vmatpush.bf16.msra.mxu0 %v386
    %462 = vmatpush.bf16.msra.mxu0 %v382
    %463 = vmatpush.bf16.msra.mxu0 %v378
    %464 = vmatpush.bf16.msra.mxu0 %v374
    %465 = vmatpush.bf16.msra.mxu0 %v370
    %466 = vmatmul.bf16.gmra.mxu0 0
    %v467 = vpop.f32.mrf.mxu0
    %v468 = vadd.f32 0.0, %v467
    %v469 = vpop.f32.mrf.mxu0
    %470 = vdwg.mxu0
    %471 = vmatpush.bf16.msra.mxu0 %v399
    %472 = vmatpush.bf16.msra.mxu0 %v395
    %473 = vmatpush.bf16.msra.mxu0 %v391
    %474 = vmatpush.bf16.msra.mxu0 %v387
    %475 = vmatpush.bf16.msra.mxu0 %v383
    %476 = vmatpush.bf16.msra.mxu0 %v379
    %477 = vmatpush.bf16.msra.mxu0 %v375
    %478 = vmatpush.bf16.msra.mxu0 %v371
    %479 = vmatmul.bf16.gmra.mxu0 0
    %v480 = vpop.f32.mrf.mxu0
    %v481 = vadd.f32 0.0, %v480
    %v482 = vpop.f32.mrf.mxu0
    %483 = vdwg.mxu0
    %v484 = vadd.f32 %v134, %v442
    %v485 = vadd.f32 %v163, %v455
    %v486 = vadd.f32 %v192, %v468
    %v487 = vadd.f32 %v221, %v481
    %v488 = vxor.u32 %v484, 2147483648
    %v489 = vxor.u32 %v485, 2147483648
    %v490 = vxor.u32 %v486, 2147483648
    %v491 = vmul.f32 %v488, 1.442695
    %v492 = vpow.pop %v491
    %v493 = vmul.f32 %v489, 1.442695
    %v494 = vpow.pop %v493
    %v495 = vmul.f32 %v490, 1.442695
    %v496 = vpow.pop %v495
    %v497 = vadd.f32 %v492, 1.0
    %v498 = vadd.f32 %v494, 1.0
    %v499 = vadd.f32 %v496, 1.0
    %v500 = vrcp.pop %v497
    %v501 = vmul.f32 %v497, %v500
    %v502 = vsub.f32 1.0, %v501
    %v503 = vmul.f32 %v500, %v502
    %v504 = vadd.f32 %v500, %v503
    %vm505 = vweird.f32 %v497
    %vm506 = vweird.f32 %v500
    %vm507 = vmor %vm505, %vm506
    %v508 = vsel %vm507, %v500, %v504
    %v509 = vand.u32 2147483647, %v497
    %vm510 = vcmp.eq.f32.partialorder %v509, 8.507059e+37
    %v511 = vand.u32 %v497, 2147483648
    %v512 = vor.u32 1.1754944e-38, %v511
    %v513 = vsel %vm510, %v512, %v508
    %v514 = vmul.f32 1.0, %v513
    %v515 = vrcp.pop %v498
    %v516 = vmul.f32 %v498, %v515
    %v517 = vsub.f32 1.0, %v516
    %v518 = vmul.f32 %v515, %v517
    %v519 = vadd.f32 %v515, %v518
    %vm520 = vweird.f32 %v498
    %vm521 = vweird.f32 %v515
    %vm522 = vmor %vm520, %vm521
    %v523 = vsel %vm522, %v515, %v519
    %v524 = vand.u32 2147483647, %v498
    %vm525 = vcmp.eq.f32.partialorder %v524, 8.507059e+37
    %v526 = vand.u32 %v498, 2147483648
    %v527 = vor.u32 1.1754944e-38, %v526
    %v528 = vsel %vm525, %v527, %v523
    %v529 = vmul.f32 1.0, %v528
    %v530 = vrcp.pop %v499
    %v531 = vmul.f32 %v499, %v530
    %v532 = vsub.f32 1.0, %v531
    %v533 = vmul.f32 %v530, %v532
    %v534 = vadd.f32 %v530, %v533
    %vm535 = vweird.f32 %v499
    %vm536 = vweird.f32 %v530
    %vm537 = vmor %vm535, %vm536
    %v538 = vsel %vm537, %v530, %v534
    %v539 = vand.u32 2147483647, %v499
    %vm540 = vcmp.eq.f32.partialorder %v539, 8.507059e+37
    %v541 = vand.u32 %v499, 2147483648
    %v542 = vor.u32 1.1754944e-38, %v541
    %v543 = vsel %vm540, %v542, %v538
    %v544 = vmul.f32 1.0, %v543
    %v545 = vtanh.pop %v487
    %v546 = vmul.f32 %v529, 0.0
    %v547 = vmul.f32 %v514, %v545
    %v548 = vadd.f32 %v546, %v547
    %v549 = vtanh.pop %v548
    %v550 = vmul.f32 %v544, %v549
    %v551 = vpack.c.bf16 %v550, %v550
    %552 = vmatpush.bf16.msra.mxu0 %v396
    %553 = vmatpush.bf16.msra.mxu0 %v392
    %554 = vmatpush.bf16.msra.mxu0 %v388
    %555 = vmatpush.bf16.msra.mxu0 %v384
    %556 = vmatpush.bf16.msra.mxu0 %v380
    %557 = vmatpush.bf16.msra.mxu0 %v376
    %558 = vmatpush.bf16.msra.mxu0 %v372
    %559 = vmatpush.bf16.msra.mxu0 %v368
    %560 = vmatmul.bf16.gmra.mxu0 %v551
    %v561 = vpop.f32.mrf.mxu0
    %v562 = vadd.f32 0.0, %v561
    %v563 = vpop.f32.mrf.mxu0
    %564 = vdwg.mxu0
    %565 = vmatpush.bf16.msra.mxu0 %v397
    %566 = vmatpush.bf16.msra.mxu0 %v393
    %567 = vmatpush.bf16.msra.mxu0 %v389
    %568 = vmatpush.bf16.msra.mxu0 %v385
    %569 = vmatpush.bf16.msra.mxu0 %v381
    %570 = vmatpush.bf16.msra.mxu0 %v377
    %571 = vmatpush.bf16.msra.mxu0 %v373
    %572 = vmatpush.bf16.msra.mxu0 %v369
    %573 = vmatmul.bf16.gmra.mxu0 %v551
    %v574 = vpop.f32.mrf.mxu0
    %v575 = vadd.f32 0.0, %v574
    %v576 = vpop.f32.mrf.mxu0
    %577 = vdwg.mxu0
    %578 = vmatpush.bf16.msra.mxu0 %v398
    %579 = vmatpush.bf16.msra.mxu0 %v394
    %580 = vmatpush.bf16.msra.mxu0 %v390
    %581 = vmatpush.bf16.msra.mxu0 %v386
    %582 = vmatpush.bf16.msra.mxu0 %v382
    %583 = vmatpush.bf16.msra.mxu0 %v378
    %584 = vmatpush.bf16.msra.mxu0 %v374
    %585 = vmatpush.bf16.msra.mxu0 %v370
    %586 = vmatmul.bf16.gmra.mxu0 %v551
    %v587 = vpop.f32.mrf.mxu0
    %v588 = vadd.f32 0.0, %v587
    %v589 = vpop.f32.mrf.mxu0
    %590 = vdwg.mxu0
    %591 = vmatpush.bf16.msra.mxu0 %v399
    %592 = vmatpush.bf16.msra.mxu0 %v395
    %593 = vmatpush.bf16.msra.mxu0 %v391
    %594 = vmatpush.bf16.msra.mxu0 %v387
    %595 = vmatpush.bf16.msra.mxu0 %v383
    %596 = vmatpush.bf16.msra.mxu0 %v379
    %597 = vmatpush.bf16.msra.mxu0 %v375
    %598 = vmatpush.bf16.msra.mxu0 %v371
    %599 = vmatmul.bf16.gmra.mxu0 %v551
    %v600 = vpop.f32.mrf.mxu0
    %v601 = vadd.f32 0.0, %v600
    %v602 = vpop.f32.mrf.mxu0
    %603 = vdwg.mxu0
    %v604 = vadd.f32 %v136, %v562
    %v605 = vadd.f32 %v165, %v575
    %v606 = vadd.f32 %v194, %v588
    %v607 = vadd.f32 %v223, %v601
    %v608 = vxor.u32 %v604, 2147483648
    %v609 = vxor.u32 %v605, 2147483648
    %v610 = vxor.u32 %v606, 2147483648
    %v611 = vmul.f32 %v608, 1.442695
    %v612 = vpow.pop %v611
    %v613 = vmul.f32 %v609, 1.442695
    %v614 = vpow.pop %v613
    %v615 = vmul.f32 %v610, 1.442695
    %v616 = vpow.pop %v615
    %v617 = vadd.f32 %v612, 1.0
    %v618 = vadd.f32 %v614, 1.0
    %v619 = vadd.f32 %v616, 1.0
    %v620 = vrcp.pop %v617
    %v621 = vmul.f32 %v617, %v620
    %v622 = vsub.f32 1.0, %v621
    %v623 = vmul.f32 %v620, %v622
    %v624 = vadd.f32 %v620, %v623
    %vm625 = vweird.f32 %v617
    %vm626 = vweird.f32 %v620
    %vm627 = vmor %vm625, %vm626
    %v628 = vsel %vm627, %v620, %v624
    %v629 = vand.u32 2147483647, %v617
    %vm630 = vcmp.eq.f32.partialorder %v629, 8.507059e+37
    %v631 = vand.u32 %v617, 2147483648
    %v632 = vor.u32 1.1754944e-38, %v631
    %v633 = vsel %vm630, %v632, %v628
    %v634 = vmul.f32 1.0, %v633
    %v635 = vrcp.pop %v618
    %v636 = vmul.f32 %v618, %v635
    %v637 = vsub.f32 1.0, %v636
    %v638 = vmul.f32 %v635, %v637
    %v639 = vadd.f32 %v635, %v638
    %vm640 = vweird.f32 %v618
    %vm641 = vweird.f32 %v635
    %vm642 = vmor %vm640, %vm641
    %v643 = vsel %vm642, %v635, %v639
    %v644 = vand.u32 2147483647, %v618
    %vm645 = vcmp.eq.f32.partialorder %v644, 8.507059e+37
    %v646 = vand.u32 %v618, 2147483648
    %v647 = vor.u32 1.1754944e-38, %v646
    %v648 = vsel %vm645, %v647, %v643
    %v649 = vmul.f32 1.0, %v648
    %v650 = vrcp.pop %v619
    %v651 = vmul.f32 %v619, %v650
    %v652 = vsub.f32 1.0, %v651
    %v653 = vmul.f32 %v650, %v652
    %v654 = vadd.f32 %v650, %v653
    %vm655 = vweird.f32 %v619
    %vm656 = vweird.f32 %v650
    %vm657 = vmor %vm655, %vm656
    %v658 = vsel %vm657, %v650, %v654
    %v659 = vand.u32 2147483647, %v619
    %vm660 = vcmp.eq.f32.partialorder %v659, 8.507059e+37
    %v661 = vand.u32 %v619, 2147483648
    %v662 = vor.u32 1.1754944e-38, %v661
    %v663 = vsel %vm660, %v662, %v658
    %v664 = vmul.f32 1.0, %v663
    %v665 = vtanh.pop %v607
    %v666 = vmul.f32 %v649, %v548
    %v667 = vmul.f32 %v634, %v665
    %v668 = vadd.f32 %v666, %v667
    %v669 = vtanh.pop %v668
    %v670 = vmul.f32 %v664, %v669
    %v671 = vpack.c.bf16 %v670, %v670
    %672 = vmatpush.bf16.msra.mxu0 %v396
    %673 = vmatpush.bf16.msra.mxu0 %v392
    %674 = vmatpush.bf16.msra.mxu0 %v388
    %675 = vmatpush.bf16.msra.mxu0 %v384
    %676 = vmatpush.bf16.msra.mxu0 %v380
    %677 = vmatpush.bf16.msra.mxu0 %v376
    %678 = vmatpush.bf16.msra.mxu0 %v372
    %679 = vmatpush.bf16.msra.mxu0 %v368
    %680 = vmatmul.bf16.gmra.mxu0 %v671
    %v681 = vpop.f32.mrf.mxu0
    %v682 = vadd.f32 0.0, %v681
    %v683 = vpop.f32.mrf.mxu0
    %684 = vdwg.mxu0
    %685 = vmatpush.bf16.msra.mxu0 %v397
    %686 = vmatpush.bf16.msra.mxu0 %v393
    %687 = vmatpush.bf16.msra.mxu0 %v389
    %688 = vmatpush.bf16.msra.mxu0 %v385
    %689 = vmatpush.bf16.msra.mxu0 %v381
    %690 = vmatpush.bf16.msra.mxu0 %v377
    %691 = vmatpush.bf16.msra.mxu0 %v373
    %692 = vmatpush.bf16.msra.mxu0 %v369
    %693 = vmatmul.bf16.gmra.mxu0 %v671
    %v694 = vpop.f32.mrf.mxu0
    %v695 = vadd.f32 0.0, %v694
    %v696 = vpop.f32.mrf.mxu0
    %697 = vdwg.mxu0
    %698 = vmatpush.bf16.msra.mxu0 %v398
    %699 = vmatpush.bf16.msra.mxu0 %v394
    %700 = vmatpush.bf16.msra.mxu0 %v390
    %701 = vmatpush.bf16.msra.mxu0 %v386
    %702 = vmatpush.bf16.msra.mxu0 %v382
    %703 = vmatpush.bf16.msra.mxu0 %v378
    %704 = vmatpush.bf16.msra.mxu0 %v374
    %705 = vmatpush.bf16.msra.mxu0 %v370
    %706 = vmatmul.bf16.gmra.mxu0 %v671
    %v707 = vpop.f32.mrf.mxu0
    %v708 = vadd.f32 0.0, %v707
    %v709 = vpop.f32.mrf.mxu0
    %710 = vdwg.mxu0
    %711 = vmatpush.bf16.msra.mxu0 %v399
    %712 = vmatpush.bf16.msra.mxu0 %v395
    %713 = vmatpush.bf16.msra.mxu0 %v391
    %714 = vmatpush.bf16.msra.mxu0 %v387
    %715 = vmatpush.bf16.msra.mxu0 %v383
    %716 = vmatpush.bf16.msra.mxu0 %v379
    %717 = vmatpush.bf16.msra.mxu0 %v375
    %718 = vmatpush.bf16.msra.mxu0 %v371
    %719 = vmatmul.bf16.gmra.mxu0 %v671
    %v720 = vpop.f32.mrf.mxu0
    %v721 = vadd.f32 0.0, %v720
    %v722 = vpop.f32.mrf.mxu0
    %723 = vdwg.mxu0
    %v724 = vadd.f32 %v139, %v682
    %v725 = vadd.f32 %v168, %v695
    %v726 = vadd.f32 %v197, %v708
    %v727 = vadd.f32 %v226, %v721
    %v728 = vxor.u32 %v724, 2147483648
    %v729 = vxor.u32 %v725, 2147483648
    %v730 = vxor.u32 %v726, 2147483648
    %v731 = vmul.f32 %v728, 1.442695
    %v732 = vpow.pop %v731
    %v733 = vmul.f32 %v729, 1.442695
    %v734 = vpow.pop %v733
    %v735 = vmul.f32 %v730, 1.442695
    %v736 = vpow.pop %v735
    %v737 = vadd.f32 %v732, 1.0
    %v738 = vadd.f32 %v734, 1.0
    %v739 = vadd.f32 %v736, 1.0
    %v740 = vrcp.pop %v737
    %v741 = vmul.f32 %v737, %v740
    %v742 = vsub.f32 1.0, %v741
    %v743 = vmul.f32 %v740, %v742
    %v744 = vadd.f32 %v740, %v743
    %vm745 = vweird.f32 %v737
    %vm746 = vweird.f32 %v740
    %vm747 = vmor %vm745, %vm746
    %v748 = vsel %vm747, %v740, %v744
    %v749 = vand.u32 2147483647, %v737
    %vm750 = vcmp.eq.f32.partialorder %v749, 8.507059e+37
    %v751 = vand.u32 %v737, 2147483648
    %v752 = vor.u32 1.1754944e-38, %v751
    %v753 = vsel %vm750, %v752, %v748
    %v754 = vmul.f32 1.0, %v753
    %v755 = vrcp.pop %v738
    %v756 = vmul.f32 %v738, %v755
    %v757 = vsub.f32 1.0, %v756
    %v758 = vmul.f32 %v755, %v757
    %v759 = vadd.f32 %v755, %v758
    %vm760 = vweird.f32 %v738
    %vm761 = vweird.f32 %v755
    %vm762 = vmor %vm760, %vm761
    %v763 = vsel %vm762, %v755, %v759
    %v764 = vand.u32 2147483647, %v738
    %vm765 = vcmp.eq.f32.partialorder %v764, 8.507059e+37
    %v766 = vand.u32 %v738, 2147483648
    %v767 = vor.u32 1.1754944e-38, %v766
    %v768 = vsel %vm765, %v767, %v763
    %v769 = vmul.f32 1.0, %v768
    %v770 = vrcp.pop %v739
    %v771 = vmul.f32 %v739, %v770
    %v772 = vsub.f32 1.0, %v771
    %v773 = vmul.f32 %v770, %v772
    %v774 = vadd.f32 %v770, %v773
    %vm775 = vweird.f32 %v739
    %vm776 = vweird.f32 %v770
    %vm777 = vmor %vm775, %vm776
    %v778 = vsel %vm777, %v770, %v774
    %v779 = vand.u32 2147483647, %v739
    %vm780 = vcmp.eq.f32.partialorder %v779, 8.507059e+37
    %v781 = vand.u32 %v739, 2147483648
    %v782 = vor.u32 1.1754944e-38, %v781
    %v783 = vsel %vm780, %v782, %v778
    %v784 = vmul.f32 1.0, %v783
    %v785 = vtanh.pop %v727
    %v786 = vmul.f32 %v769, %v668
    %v787 = vmul.f32 %v754, %v785
    %v788 = vadd.f32 %v786, %v787
    %v789 = vtanh.pop %v788
    %v790 = vmul.f32 %v784, %v789
    %v791 = vpack.c.bf16 %v790, %v790
    %792 = vmatpush.bf16.msra.mxu0 %v396
    %793 = vmatpush.bf16.msra.mxu0 %v392
    %794 = vmatpush.bf16.msra.mxu0 %v388
    %795 = vmatpush.bf16.msra.mxu0 %v384
    %796 = vmatpush.bf16.msra.mxu0 %v380
    %797 = vmatpush.bf16.msra.mxu0 %v376
    %798 = vmatpush.bf16.msra.mxu0 %v372
    %799 = vmatpush.bf16.msra.mxu0 %v368
    %800 = vmatmul.bf16.gmra.mxu0 %v791
    %v801 = vpop.f32.mrf.mxu0
    %v802 = vadd.f32 0.0, %v801
    %v803 = vpop.f32.mrf.mxu0
    %804 = vdwg.mxu0
    %805 = vmatpush.bf16.msra.mxu0 %v397
    %806 = vmatpush.bf16.msra.mxu0 %v393
    %807 = vmatpush.bf16.msra.mxu0 %v389
    %808 = vmatpush.bf16.msra.mxu0 %v385
    %809 = vmatpush.bf16.msra.mxu0 %v381
    %810 = vmatpush.bf16.msra.mxu0 %v377
    %811 = vmatpush.bf16.msra.mxu0 %v373
    %812 = vmatpush.bf16.msra.mxu0 %v369
    %813 = vmatmul.bf16.gmra.mxu0 %v791
    %v814 = vpop.f32.mrf.mxu0
    %v815 = vadd.f32 0.0, %v814
    %v816 = vpop.f32.mrf.mxu0
    %817 = vdwg.mxu0
    %818 = vmatpush.bf16.msra.mxu0 %v398
    %819 = vmatpush.bf16.msra.mxu0 %v394
    %820 = vmatpush.bf16.msra.mxu0 %v390
    %821 = vmatpush.bf16.msra.mxu0 %v386
    %822 = vmatpush.bf16.msra.mxu0 %v382
    %823 = vmatpush.bf16.msra.mxu0 %v378
    %824 = vmatpush.bf16.msra.mxu0 %v374
    %825 = vmatpush.bf16.msra.mxu0 %v370
    %826 = vmatmul.bf16.gmra.mxu0 %v791
    %v827 = vpop.f32.mrf.mxu0
    %v828 = vadd.f32 0.0, %v827
    %v829 = vpop.f32.mrf.mxu0
    %830 = vdwg.mxu0
    %831 = vmatpush.bf16.msra.mxu0 %v399
    %832 = vmatpush.bf16.msra.mxu0 %v395
    %833 = vmatpush.bf16.msra.mxu0 %v391
    %834 = vmatpush.bf16.msra.mxu0 %v387
    %835 = vmatpush.bf16.msra.mxu0 %v383
    %836 = vmatpush.bf16.msra.mxu0 %v379
    %837 = vmatpush.bf16.msra.mxu0 %v375
    %838 = vmatpush.bf16.msra.mxu0 %v371
    %839 = vmatmul.bf16.gmra.mxu0 %v791
    %v840 = vpop.f32.mrf.mxu0
    %v841 = vadd.f32 0.0, %v840
    %v842 = vpop.f32.mrf.mxu0
    %843 = vdwg.mxu0
    %v844 = vadd.f32 %v141, %v802
    %v845 = vadd.f32 %v170, %v815
    %v846 = vadd.f32 %v199, %v828
    %v847 = vadd.f32 %v228, %v841
    %v848 = vxor.u32 %v844, 2147483648
    %v849 = vxor.u32 %v845, 2147483648
    %v850 = vxor.u32 %v846, 2147483648
    %v851 = vmul.f32 %v848, 1.442695
    %v852 = vpow.pop %v851
    %v853 = vmul.f32 %v849, 1.442695
    %v854 = vpow.pop %v853
    %v855 = vmul.f32 %v850, 1.442695
    %v856 = vpow.pop %v855
    %v857 = vadd.f32 %v852, 1.0
    %v858 = vadd.f32 %v854, 1.0
    %v859 = vadd.f32 %v856, 1.0
    %v860 = vrcp.pop %v857
    %v861 = vmul.f32 %v857, %v860
    %v862 = vsub.f32 1.0, %v861
    %v863 = vmul.f32 %v860, %v862
    %v864 = vadd.f32 %v860, %v863
    %vm865 = vweird.f32 %v857
    %vm866 = vweird.f32 %v860
    %vm867 = vmor %vm865, %vm866
    %v868 = vsel %vm867, %v860, %v864
    %v869 = vand.u32 2147483647, %v857
    %vm870 = vcmp.eq.f32.partialorder %v869, 8.507059e+37
    %v871 = vand.u32 %v857, 2147483648
    %v872 = vor.u32 1.1754944e-38, %v871
    %v873 = vsel %vm870, %v872, %v868
    %v874 = vmul.f32 1.0, %v873
    %v875 = vrcp.pop %v858
    %v876 = vmul.f32 %v858, %v875
    %v877 = vsub.f32 1.0, %v876
    %v878 = vmul.f32 %v875, %v877
    %v879 = vadd.f32 %v875, %v878
    %vm880 = vweird.f32 %v858
    %vm881 = vweird.f32 %v875
    %vm882 = vmor %vm880, %vm881
    %v883 = vsel %vm882, %v875, %v879
    %v884 = vand.u32 2147483647, %v858
    %vm885 = vcmp.eq.f32.partialorder %v884, 8.507059e+37
    %v886 = vand.u32 %v858, 2147483648
    %v887 = vor.u32 1.1754944e-38, %v886
    %v888 = vsel %vm885, %v887, %v883
    %v889 = vmul.f32 1.0, %v888
    %v890 = vrcp.pop %v859
    %v891 = vmul.f32 %v859, %v890
    %v892 = vsub.f32 1.0, %v891
    %v893 = vmul.f32 %v890, %v892
    %v894 = vadd.f32 %v890, %v893
    %vm895 = vweird.f32 %v859
    %vm896 = vweird.f32 %v890
    %vm897 = vmor %vm895, %vm896
    %v898 = vsel %vm897, %v890, %v894
    %v899 = vand.u32 2147483647, %v859
    %vm900 = vcmp.eq.f32.partialorder %v899, 8.507059e+37
    %v901 = vand.u32 %v859, 2147483648
    %v902 = vor.u32 1.1754944e-38, %v901
    %v903 = vsel %vm900, %v902, %v898
    %v904 = vmul.f32 1.0, %v903
    %v905 = vtanh.pop %v847
    %v906 = vmul.f32 %v889, %v788
    %v907 = vmul.f32 %v874, %v905
    %v908 = vadd.f32 %v906, %v907
    %v909 = vtanh.pop %v908
    %v910 = vmul.f32 %v904, %v909
    %v911 = vpack.c.bf16 %v910, %v910
    %912 = vmatpush.bf16.msra.mxu0 %v396
    %913 = vmatpush.bf16.msra.mxu0 %v392
    %914 = vmatpush.bf16.msra.mxu0 %v388
    %915 = vmatpush.bf16.msra.mxu0 %v384
    %916 = vmatpush.bf16.msra.mxu0 %v380
    %917 = vmatpush.bf16.msra.mxu0 %v376
    %918 = vmatpush.bf16.msra.mxu0 %v372
    %919 = vmatpush.bf16.msra.mxu0 %v368
    %920 = vmatmul.bf16.gmra.mxu0 %v911
    %v921 = vpop.f32.mrf.mxu0
    %v922 = vadd.f32 0.0, %v921
    %v923 = vpop.f32.mrf.mxu0
    %924 = vdwg.mxu0
    %925 = vmatpush.bf16.msra.mxu0 %v397
    %926 = vmatpush.bf16.msra.mxu0 %v393
    %927 = vmatpush.bf16.msra.mxu0 %v389
    %928 = vmatpush.bf16.msra.mxu0 %v385
    %929 = vmatpush.bf16.msra.mxu0 %v381
    %930 = vmatpush.bf16.msra.mxu0 %v377
    %931 = vmatpush.bf16.msra.mxu0 %v373
    %932 = vmatpush.bf16.msra.mxu0 %v369
    %933 = vmatmul.bf16.gmra.mxu0 %v911
    %v934 = vpop.f32.mrf.mxu0
    %v935 = vadd.f32 0.0, %v934
    %v936 = vpop.f32.mrf.mxu0
    %937 = vdwg.mxu0
    %938 = vmatpush.bf16.msra.mxu0 %v398
    %939 = vmatpush.bf16.msra.mxu0 %v394
    %940 = vmatpush.bf16.msra.mxu0 %v390
    %941 = vmatpush.bf16.msra.mxu0 %v386
    %942 = vmatpush.bf16.msra.mxu0 %v382
    %943 = vmatpush.bf16.msra.mxu0 %v378
    %944 = vmatpush.bf16.msra.mxu0 %v374
    %945 = vmatpush.bf16.msra.mxu0 %v370
    %946 = vmatmul.bf16.gmra.mxu0 %v911
    %v947 = vpop.f32.mrf.mxu0
    %v948 = vadd.f32 0.0, %v947
    %v949 = vpop.f32.mrf.mxu0
    %950 = vdwg.mxu0
    %951 = vmatpush.bf16.msra.mxu0 %v399
    %952 = vmatpush.bf16.msra.mxu0 %v395
    %953 = vmatpush.bf16.msra.mxu0 %v391
    %954 = vmatpush.bf16.msra.mxu0 %v387
    %955 = vmatpush.bf16.msra.mxu0 %v383
    %956 = vmatpush.bf16.msra.mxu0 %v379
    %957 = vmatpush.bf16.msra.mxu0 %v375
    %958 = vmatpush.bf16.msra.mxu0 %v371
    %959 = vmatmul.bf16.gmra.mxu0 %v911
    %v960 = vpop.f32.mrf.mxu0
    %v961 = vadd.f32 0.0, %v960
    %v962 = vpop.f32.mrf.mxu0
    %963 = vdwg.mxu0
    %v964 = vadd.f32 %v144, %v922
    %v965 = vadd.f32 %v173, %v935
    %v966 = vadd.f32 %v202, %v948
    %v967 = vadd.f32 %v231, %v961
    %v968 = vxor.u32 %v964, 2147483648
    %v969 = vxor.u32 %v965, 2147483648
    %v970 = vxor.u32 %v966, 2147483648
    %v971 = vmul.f32 %v968, 1.442695
    %v972 = vpow.pop %v971
    %v973 = vmul.f32 %v969, 1.442695
    %v974 = vpow.pop %v973
    %v975 = vmul.f32 %v970, 1.442695
    %v976 = vpow.pop %v975
    %v977 = vadd.f32 %v972, 1.0
    %v978 = vadd.f32 %v974, 1.0
    %v979 = vadd.f32 %v976, 1.0
    %v980 = vrcp.pop %v977
    %v981 = vmul.f32 %v977, %v980
    %v982 = vsub.f32 1.0, %v981
    %v983 = vmul.f32 %v980, %v982
    %v984 = vadd.f32 %v980, %v983
    %vm985 = vweird.f32 %v977
    %vm986 = vweird.f32 %v980
    %vm987 = vmor %vm985, %vm986
    %v988 = vsel %vm987, %v980, %v984
    %v989 = vand.u32 2147483647, %v977
    %vm990 = vcmp.eq.f32.partialorder %v989, 8.507059e+37
    %v991 = vand.u32 %v977, 2147483648
    %v992 = vor.u32 1.1754944e-38, %v991
    %v993 = vsel %vm990, %v992, %v988
    %v994 = vmul.f32 1.0, %v993
    %v995 = vrcp.pop %v978
    %v996 = vmul.f32 %v978, %v995
    %v997 = vsub.f32 1.0, %v996
    %v998 = vmul.f32 %v995, %v997
    %v999 = vadd.f32 %v995, %v998
    %vm1000 = vweird.f32 %v978
    %vm1001 = vweird.f32 %v995
    %vm1002 = vmor %vm1000, %vm1001
    %v1003 = vsel %vm1002, %v995, %v999
    %v1004 = vand.u32 2147483647, %v978
    %vm1005 = vcmp.eq.f32.partialorder %v1004, 8.507059e+37
    %v1006 = vand.u32 %v978, 2147483648
    %v1007 = vor.u32 1.1754944e-38, %v1006
    %v1008 = vsel %vm1005, %v1007, %v1003
    %v1009 = vmul.f32 1.0, %v1008
    %v1010 = vrcp.pop %v979
    %v1011 = vmul.f32 %v979, %v1010
    %v1012 = vsub.f32 1.0, %v1011
    %v1013 = vmul.f32 %v1010, %v1012
    %v1014 = vadd.f32 %v1010, %v1013
    %vm1015 = vweird.f32 %v979
    %vm1016 = vweird.f32 %v1010
    %vm1017 = vmor %vm1015, %vm1016
    %v1018 = vsel %vm1017, %v1010, %v1014
    %v1019 = vand.u32 2147483647, %v979
    %vm1020 = vcmp.eq.f32.partialorder %v1019, 8.507059e+37
    %v1021 = vand.u32 %v979, 2147483648
    %v1022 = vor.u32 1.1754944e-38, %v1021
    %v1023 = vsel %vm1020, %v1022, %v1018
    %v1024 = vmul.f32 1.0, %v1023
    %v1025 = vtanh.pop %v967
    %v1026 = vmul.f32 %v1009, %v908
    %v1027 = vmul.f32 %v994, %v1025
    %v1028 = vadd.f32 %v1026, %v1027
    %v1029 = vtanh.pop %v1028
    %v1030 = vmul.f32 %v1024, %v1029
    %v1031 = vpack.c.bf16 %v1030, %v1030
    %1032 = vmatpush.bf16.msra.mxu0 %v396
    %1033 = vmatpush.bf16.msra.mxu0 %v392
    %1034 = vmatpush.bf16.msra.mxu0 %v388
    %1035 = vmatpush.bf16.msra.mxu0 %v384
    %1036 = vmatpush.bf16.msra.mxu0 %v380
    %1037 = vmatpush.bf16.msra.mxu0 %v376
    %1038 = vmatpush.bf16.msra.mxu0 %v372
    %1039 = vmatpush.bf16.msra.mxu0 %v368
    %1040 = vmatmul.bf16.gmra.mxu0 %v1031
    %v1041 = vpop.f32.mrf.mxu0
    %v1042 = vadd.f32 0.0, %v1041
    %v1043 = vpop.f32.mrf.mxu0
    %1044 = vdwg.mxu0
    %1045 = vmatpush.bf16.msra.mxu0 %v397
    %1046 = vmatpush.bf16.msra.mxu0 %v393
    %1047 = vmatpush.bf16.msra.mxu0 %v389
    %1048 = vmatpush.bf16.msra.mxu0 %v385
    %1049 = vmatpush.bf16.msra.mxu0 %v381
    %1050 = vmatpush.bf16.msra.mxu0 %v377
    %1051 = vmatpush.bf16.msra.mxu0 %v373
    %1052 = vmatpush.bf16.msra.mxu0 %v369
    %1053 = vmatmul.bf16.gmra.mxu0 %v1031
    %v1054 = vpop.f32.mrf.mxu0
    %v1055 = vadd.f32 0.0, %v1054
    %v1056 = vpop.f32.mrf.mxu0
    %1057 = vdwg.mxu0
    %1058 = vmatpush.bf16.msra.mxu0 %v398
    %1059 = vmatpush.bf16.msra.mxu0 %v394
    %1060 = vmatpush.bf16.msra.mxu0 %v390
    %1061 = vmatpush.bf16.msra.mxu0 %v386
    %1062 = vmatpush.bf16.msra.mxu0 %v382
    %1063 = vmatpush.bf16.msra.mxu0 %v378
    %1064 = vmatpush.bf16.msra.mxu0 %v374
    %1065 = vmatpush.bf16.msra.mxu0 %v370
    %1066 = vmatmul.bf16.gmra.mxu0 %v1031
    %v1067 = vpop.f32.mrf.mxu0
    %v1068 = vadd.f32 0.0, %v1067
    %v1069 = vpop.f32.mrf.mxu0
    %1070 = vdwg.mxu0
    %1071 = vmatpush.bf16.msra.mxu0 %v399
    %1072 = vmatpush.bf16.msra.mxu0 %v395
    %1073 = vmatpush.bf16.msra.mxu0 %v391
    %1074 = vmatpush.bf16.msra.mxu0 %v387
    %1075 = vmatpush.bf16.msra.mxu0 %v383
    %1076 = vmatpush.bf16.msra.mxu0 %v379
    %1077 = vmatpush.bf16.msra.mxu0 %v375
    %1078 = vmatpush.bf16.msra.mxu0 %v371
    %1079 = vmatmul.bf16.gmra.mxu0 %v1031
    %v1080 = vpop.f32.mrf.mxu0
    %v1081 = vadd.f32 0.0, %v1080
    %v1082 = vpop.f32.mrf.mxu0
    %1083 = vdwg.mxu0
    %v1084 = vadd.f32 %v146, %v1042
    %v1085 = vadd.f32 %v175, %v1055
    %v1086 = vadd.f32 %v204, %v1068
    %v1087 = vadd.f32 %v233, %v1081
    %v1088 = vxor.u32 %v1084, 2147483648
    %v1089 = vxor.u32 %v1085, 2147483648
    %v1090 = vxor.u32 %v1086, 2147483648
    %v1091 = vmul.f32 %v1088, 1.442695
    %v1092 = vpow.pop %v1091
    %v1093 = vmul.f32 %v1089, 1.442695
    %v1094 = vpow.pop %v1093
    %v1095 = vmul.f32 %v1090, 1.442695
    %v1096 = vpow.pop %v1095
    %v1097 = vadd.f32 %v1092, 1.0
    %v1098 = vadd.f32 %v1094, 1.0
    %v1099 = vadd.f32 %v1096, 1.0
    %v1100 = vrcp.pop %v1097
    %v1101 = vmul.f32 %v1097, %v1100
    %v1102 = vsub.f32 1.0, %v1101
    %v1103 = vmul.f32 %v1100, %v1102
    %v1104 = vadd.f32 %v1100, %v1103
    %vm1105 = vweird.f32 %v1097
    %vm1106 = vweird.f32 %v1100
    %vm1107 = vmor %vm1105, %vm1106
    %v1108 = vsel %vm1107, %v1100, %v1104
    %v1109 = vand.u32 2147483647, %v1097
    %vm1110 = vcmp.eq.f32.partialorder %v1109, 8.507059e+37
    %v1111 = vand.u32 %v1097, 2147483648
    %v1112 = vor.u32 1.1754944e-38, %v1111
    %v1113 = vsel %vm1110, %v1112, %v1108
    %v1114 = vmul.f32 1.0, %v1113
    %v1115 = vrcp.pop %v1098
    %v1116 = vmul.f32 %v1098, %v1115
    %v1117 = vsub.f32 1.0, %v1116
    %v1118 = vmul.f32 %v1115, %v1117
    %v1119 = vadd.f32 %v1115, %v1118
    %vm1120 = vweird.f32 %v1098
    %vm1121 = vweird.f32 %v1115
    %vm1122 = vmor %vm1120, %vm1121
    %v1123 = vsel %vm1122, %v1115, %v1119
    %v1124 = vand.u32 2147483647, %v1098
    %vm1125 = vcmp.eq.f32.partialorder %v1124, 8.507059e+37
    %v1126 = vand.u32 %v1098, 2147483648
    %v1127 = vor.u32 1.1754944e-38, %v1126
    %v1128 = vsel %vm1125, %v1127, %v1123
    %v1129 = vmul.f32 1.0, %v1128
    %v1130 = vrcp.pop %v1099
    %v1131 = vmul.f32 %v1099, %v1130
    %v1132 = vsub.f32 1.0, %v1131
    %v1133 = vmul.f32 %v1130, %v1132
    %v1134 = vadd.f32 %v1130, %v1133
    %vm1135 = vweird.f32 %v1099
    %vm1136 = vweird.f32 %v1130
    %vm1137 = vmor %vm1135, %vm1136
    %v1138 = vsel %vm1137, %v1130, %v1134
    %v1139 = vand.u32 2147483647, %v1099
    %vm1140 = vcmp.eq.f32.partialorder %v1139, 8.507059e+37
    %v1141 = vand.u32 %v1099, 2147483648
    %v1142 = vor.u32 1.1754944e-38, %v1141
    %v1143 = vsel %vm1140, %v1142, %v1138
    %v1144 = vmul.f32 1.0, %v1143
    %v1145 = vtanh.pop %v1087
    %v1146 = vmul.f32 %v1129, %v1028
    %v1147 = vmul.f32 %v1114, %v1145
    %v1148 = vadd.f32 %v1146, %v1147
    %v1149 = vtanh.pop %v1148
    %v1150 = vmul.f32 %v1144, %v1149
    %v1151 = vpack.c.bf16 %v1150, %v1150
    %1152 = vmatpush.bf16.msra.mxu0 %v396
    %1153 = vmatpush.bf16.msra.mxu0 %v392
    %1154 = vmatpush.bf16.msra.mxu0 %v388
    %1155 = vmatpush.bf16.msra.mxu0 %v384
    %1156 = vmatpush.bf16.msra.mxu0 %v380
    %1157 = vmatpush.bf16.msra.mxu0 %v376
    %1158 = vmatpush.bf16.msra.mxu0 %v372
    %1159 = vmatpush.bf16.msra.mxu0 %v368
    %1160 = vmatmul.bf16.gmra.mxu0 %v1151
    %v1161 = vpop.f32.mrf.mxu0
    %v1162 = vadd.f32 0.0, %v1161
    %v1163 = vpop.f32.mrf.mxu0
    %1164 = vdwg.mxu0
    %1165 = vmatpush.bf16.msra.mxu0 %v397
    %1166 = vmatpush.bf16.msra.mxu0 %v393
    %1167 = vmatpush.bf16.msra.mxu0 %v389
    %1168 = vmatpush.bf16.msra.mxu0 %v385
    %1169 = vmatpush.bf16.msra.mxu0 %v381
    %1170 = vmatpush.bf16.msra.mxu0 %v377
    %1171 = vmatpush.bf16.msra.mxu0 %v373
    %1172 = vmatpush.bf16.msra.mxu0 %v369
    %1173 = vmatmul.bf16.gmra.mxu0 %v1151
    %v1174 = vpop.f32.mrf.mxu0
    %v1175 = vadd.f32 0.0, %v1174
    %v1176 = vpop.f32.mrf.mxu0
    %1177 = vdwg.mxu0
    %1178 = vmatpush.bf16.msra.mxu0 %v398
    %1179 = vmatpush.bf16.msra.mxu0 %v394
    %1180 = vmatpush.bf16.msra.mxu0 %v390
    %1181 = vmatpush.bf16.msra.mxu0 %v386
    %1182 = vmatpush.bf16.msra.mxu0 %v382
    %1183 = vmatpush.bf16.msra.mxu0 %v378
    %1184 = vmatpush.bf16.msra.mxu0 %v374
    %1185 = vmatpush.bf16.msra.mxu0 %v370
    %1186 = vmatmul.bf16.gmra.mxu0 %v1151
    %v1187 = vpop.f32.mrf.mxu0
    %v1188 = vadd.f32 0.0, %v1187
    %v1189 = vpop.f32.mrf.mxu0
    %1190 = vdwg.mxu0
    %1191 = vmatpush.bf16.msra.mxu0 %v399
    %1192 = vmatpush.bf16.msra.mxu0 %v395
    %1193 = vmatpush.bf16.msra.mxu0 %v391
    %1194 = vmatpush.bf16.msra.mxu0 %v387
    %1195 = vmatpush.bf16.msra.mxu0 %v383
    %1196 = vmatpush.bf16.msra.mxu0 %v379
    %1197 = vmatpush.bf16.msra.mxu0 %v375
    %1198 = vmatpush.bf16.msra.mxu0 %v371
    %1199 = vmatmul.bf16.gmra.mxu0 %v1151
    %v1200 = vpop.f32.mrf.mxu0
    %v1201 = vadd.f32 0.0, %v1200
    %v1202 = vpop.f32.mrf.mxu0
    %1203 = vdwg.mxu0
    %v1204 = vadd.f32 %v149, %v1162
    %v1205 = vadd.f32 %v178, %v1175
    %v1206 = vadd.f32 %v207, %v1188
    %v1207 = vadd.f32 %v236, %v1201
    %v1208 = vxor.u32 %v1204, 2147483648
    %v1209 = vxor.u32 %v1205, 2147483648
    %v1210 = vxor.u32 %v1206, 2147483648
    %v1211 = vmul.f32 %v1208, 1.442695
    %v1212 = vpow.pop %v1211
    %v1213 = vmul.f32 %v1209, 1.442695
    %v1214 = vpow.pop %v1213
    %v1215 = vmul.f32 %v1210, 1.442695
    %v1216 = vpow.pop %v1215
    %v1217 = vadd.f32 %v1212, 1.0
    %v1218 = vadd.f32 %v1214, 1.0
    %v1219 = vadd.f32 %v1216, 1.0
    %v1220 = vrcp.pop %v1217
    %v1221 = vmul.f32 %v1217, %v1220
    %v1222 = vsub.f32 1.0, %v1221
    %v1223 = vmul.f32 %v1220, %v1222
    %v1224 = vadd.f32 %v1220, %v1223
    %vm1225 = vweird.f32 %v1217
    %vm1226 = vweird.f32 %v1220
    %vm1227 = vmor %vm1225, %vm1226
    %v1228 = vsel %vm1227, %v1220, %v1224
    %v1229 = vand.u32 2147483647, %v1217
    %vm1230 = vcmp.eq.f32.partialorder %v1229, 8.507059e+37
    %v1231 = vand.u32 %v1217, 2147483648
    %v1232 = vor.u32 1.1754944e-38, %v1231
    %v1233 = vsel %vm1230, %v1232, %v1228
    %v1234 = vmul.f32 1.0, %v1233
    %v1235 = vrcp.pop %v1218
    %v1236 = vmul.f32 %v1218, %v1235
    %v1237 = vsub.f32 1.0, %v1236
    %v1238 = vmul.f32 %v1235, %v1237
    %v1239 = vadd.f32 %v1235, %v1238
    %vm1240 = vweird.f32 %v1218
    %vm1241 = vweird.f32 %v1235
    %vm1242 = vmor %vm1240, %vm1241
    %v1243 = vsel %vm1242, %v1235, %v1239
    %v1244 = vand.u32 2147483647, %v1218
    %vm1245 = vcmp.eq.f32.partialorder %v1244, 8.507059e+37
    %v1246 = vand.u32 %v1218, 2147483648
    %v1247 = vor.u32 1.1754944e-38, %v1246
    %v1248 = vsel %vm1245, %v1247, %v1243
    %v1249 = vmul.f32 1.0, %v1248
    %v1250 = vrcp.pop %v1219
    %v1251 = vmul.f32 %v1219, %v1250
    %v1252 = vsub.f32 1.0, %v1251
    %v1253 = vmul.f32 %v1250, %v1252
    %v1254 = vadd.f32 %v1250, %v1253
    %vm1255 = vweird.f32 %v1219
    %vm1256 = vweird.f32 %v1250
    %vm1257 = vmor %vm1255, %vm1256
    %v1258 = vsel %vm1257, %v1250, %v1254
    %v1259 = vand.u32 2147483647, %v1219
    %vm1260 = vcmp.eq.f32.partialorder %v1259, 8.507059e+37
    %v1261 = vand.u32 %v1219, 2147483648
    %v1262 = vor.u32 1.1754944e-38, %v1261
    %v1263 = vsel %vm1260, %v1262, %v1258
    %v1264 = vmul.f32 1.0, %v1263
    %v1265 = vtanh.pop %v1207
    %v1266 = vmul.f32 %v1249, %v1148
    %v1267 = vmul.f32 %v1234, %v1265
    %v1268 = vadd.f32 %v1266, %v1267
    %v1269 = vtanh.pop %v1268
    %v1270 = vmul.f32 %v1264, %v1269
    %v1271 = vpack.c.bf16 %v1270, %v1270
    %1272 = vmatpush.bf16.msra.mxu0 %v396
    %1273 = vmatpush.bf16.msra.mxu0 %v392
    %1274 = vmatpush.bf16.msra.mxu0 %v388
    %1275 = vmatpush.bf16.msra.mxu0 %v384
    %1276 = vmatpush.bf16.msra.mxu0 %v380
    %1277 = vmatpush.bf16.msra.mxu0 %v376
    %1278 = vmatpush.bf16.msra.mxu0 %v372
    %1279 = vmatpush.bf16.msra.mxu0 %v368
    %1280 = vmatmul.bf16.gmra.mxu0 %v1271
    %v1281 = vpop.f32.mrf.mxu0
    %v1282 = vadd.f32 0.0, %v1281
    %v1283 = vpop.f32.mrf.mxu0
    %1284 = vdwg.mxu0
    %1285 = vmatpush.bf16.msra.mxu0 %v397
    %1286 = vmatpush.bf16.msra.mxu0 %v393
    %1287 = vmatpush.bf16.msra.mxu0 %v389
    %1288 = vmatpush.bf16.msra.mxu0 %v385
    %1289 = vmatpush.bf16.msra.mxu0 %v381
    %1290 = vmatpush.bf16.msra.mxu0 %v377
    %1291 = vmatpush.bf16.msra.mxu0 %v373
    %1292 = vmatpush.bf16.msra.mxu0 %v369
    %1293 = vmatmul.bf16.gmra.mxu0 %v1271
    %v1294 = vpop.f32.mrf.mxu0
    %v1295 = vadd.f32 0.0, %v1294
    %v1296 = vpop.f32.mrf.mxu0
    %1297 = vdwg.mxu0
    %1298 = vmatpush.bf16.msra.mxu0 %v398
    %1299 = vmatpush.bf16.msra.mxu0 %v394
    %1300 = vmatpush.bf16.msra.mxu0 %v390
    %1301 = vmatpush.bf16.msra.mxu0 %v386
    %1302 = vmatpush.bf16.msra.mxu0 %v382
    %1303 = vmatpush.bf16.msra.mxu0 %v378
    %1304 = vmatpush.bf16.msra.mxu0 %v374
    %1305 = vmatpush.bf16.msra.mxu0 %v370
    %1306 = vmatmul.bf16.gmra.mxu0 %v1271
    %v1307 = vpop.f32.mrf.mxu0
    %v1308 = vadd.f32 0.0, %v1307
    %v1309 = vpop.f32.mrf.mxu0
    %1310 = vdwg.mxu0
    %1311 = vmatpush.bf16.msra.mxu0 %v399
    %1312 = vmatpush.bf16.msra.mxu0 %v395
    %1313 = vmatpush.bf16.msra.mxu0 %v391
    %1314 = vmatpush.bf16.msra.mxu0 %v387
    %1315 = vmatpush.bf16.msra.mxu0 %v383
    %1316 = vmatpush.bf16.msra.mxu0 %v379
    %1317 = vmatpush.bf16.msra.mxu0 %v375
    %1318 = vmatpush.bf16.msra.mxu0 %v371
    %1319 = vmatmul.bf16.gmra.mxu0 %v1271
    %v1320 = vpop.f32.mrf.mxu0
    %v1321 = vadd.f32 0.0, %v1320
    %v1322 = vpop.f32.mrf.mxu0
    %1323 = vdwg.mxu0
    %v1324 = vadd.f32 %v151, %v1282
    %v1325 = vadd.f32 %v180, %v1295
    %v1326 = vadd.f32 %v209, %v1308
    %v1327 = vadd.f32 %v238, %v1321
    %v1328 = vxor.u32 %v1324, 2147483648
    %v1329 = vxor.u32 %v1325, 2147483648
    %v1330 = vxor.u32 %v1326, 2147483648
    %v1331 = vmul.f32 %v1328, 1.442695
    %v1332 = vpow.pop %v1331
    %v1333 = vmul.f32 %v1329, 1.442695
    %v1334 = vpow.pop %v1333
    %v1335 = vmul.f32 %v1330, 1.442695
    %v1336 = vpow.pop %v1335
    %v1337 = vadd.f32 %v1332, 1.0
    %v1338 = vadd.f32 %v1334, 1.0
    %v1339 = vadd.f32 %v1336, 1.0
    %v1340 = vrcp.pop %v1337
    %v1341 = vmul.f32 %v1337, %v1340
    %v1342 = vsub.f32 1.0, %v1341
    %v1343 = vmul.f32 %v1340, %v1342
    %v1344 = vadd.f32 %v1340, %v1343
    %vm1345 = vweird.f32 %v1337
    %vm1346 = vweird.f32 %v1340
    %vm1347 = vmor %vm1345, %vm1346
    %v1348 = vsel %vm1347, %v1340, %v1344
    %v1349 = vand.u32 2147483647, %v1337
    %vm1350 = vcmp.eq.f32.partialorder %v1349, 8.507059e+37
    %v1351 = vand.u32 %v1337, 2147483648
    %v1352 = vor.u32 1.1754944e-38, %v1351
    %v1353 = vsel %vm1350, %v1352, %v1348
    %v1354 = vmul.f32 1.0, %v1353
    %v1355 = vrcp.pop %v1338
    %v1356 = vmul.f32 %v1338, %v1355
    %v1357 = vsub.f32 1.0, %v1356
    %v1358 = vmul.f32 %v1355, %v1357
    %v1359 = vadd.f32 %v1355, %v1358
    %vm1360 = vweird.f32 %v1338
    %vm1361 = vweird.f32 %v1355
    %vm1362 = vmor %vm1360, %vm1361
    %v1363 = vsel %vm1362, %v1355, %v1359
    %v1364 = vand.u32 2147483647, %v1338
    %vm1365 = vcmp.eq.f32.partialorder %v1364, 8.507059e+37
    %v1366 = vand.u32 %v1338, 2147483648
    %v1367 = vor.u32 1.1754944e-38, %v1366
    %v1368 = vsel %vm1365, %v1367, %v1363
    %v1369 = vmul.f32 1.0, %v1368
    %v1370 = vrcp.pop %v1339
    %v1371 = vmul.f32 %v1339, %v1370
    %v1372 = vsub.f32 1.0, %v1371
    %v1373 = vmul.f32 %v1370, %v1372
    %v1374 = vadd.f32 %v1370, %v1373
    %vm1375 = vweird.f32 %v1339
    %vm1376 = vweird.f32 %v1370
    %vm1377 = vmor %vm1375, %vm1376
    %v1378 = vsel %vm1377, %v1370, %v1374
    %v1379 = vand.u32 2147483647, %v1339
    %vm1380 = vcmp.eq.f32.partialorder %v1379, 8.507059e+37
    %v1381 = vand.u32 %v1339, 2147483648
    %v1382 = vor.u32 1.1754944e-38, %v1381
    %v1383 = vsel %vm1380, %v1382, %v1378
    %v1384 = vmul.f32 1.0, %v1383
    %v1385 = vtanh.pop %v1327
    %v1386 = vmul.f32 %v1369, %v1268
    %v1387 = vmul.f32 %v1354, %v1385
    %v1388 = vadd.f32 %v1386, %v1387
    %v1389 = vtanh.pop %v1388
    %v1390 = vmul.f32 %v1384, %v1389
    %v1391 = vmax.f32 %v1390, 0.0
    %v1392 = vpack.c.bf16 %v1391, %v1391
    %v1393 = vld [vmem:[#allocation5] sm:$0xf]
    %v1394 = vld [vmem:[#allocation5 + $0x4] sm:$0xf]
    %v1395 = vld [vmem:[#allocation5 + $0x8] sm:$0xf]
    %v1396 = vld [vmem:[#allocation5 + $0xc] sm:$0xf]
    %v1397 = vld [vmem:[#allocation5 + $0x10] sm:$0xf]
    %v1398 = vld [vmem:[#allocation5 + $0x14] sm:$0xf]
    %v1399 = vld [vmem:[#allocation5 + $0x18] sm:$0xf]
    %v1400 = vld [vmem:[#allocation5 + $0x1c] sm:$0xf]
    %v1401 = vld [vmem:[#allocation5 + $0x20] sm:$0xf]
    %v1402 = vld [vmem:[#allocation5 + $0x24] sm:$0xf]
    %v1403 = vld [vmem:[#allocation5 + $0x28] sm:$0xf]
    %v1404 = vld [vmem:[#allocation5 + $0x2c] sm:$0xf]
    %v1405 = vld [vmem:[#allocation5 + $0x30] sm:$0xf]
    %v1406 = vld [vmem:[#allocation5 + $0x34] sm:$0xf]
    %v1407 = vld [vmem:[#allocation5 + $0x38] sm:$0xf]
    %v1408 = vld [vmem:[#allocation5 + $0x3c] sm:$0xf]
    %v1409 = vld [vmem:[%s5] sm:$0x1]
    %v1411 = vperm.slane %v1409, 0
    %v1429 = vunpack.c.l.b16 %v1393
    %v1430 = vunpack.c.l.b16 %v1394
    %v1431 = vunpack.c.l.b16 %v1395
    %v1432 = vunpack.c.l.b16 %v1396
    %v1433 = vunpack.c.l.b16 %v1397
    %v1434 = vunpack.c.l.b16 %v1398
    %v1435 = vunpack.c.l.b16 %v1399
    %v1436 = vunpack.c.l.b16 %v1400
    %v1437 = vunpack.c.l.b16 %v1401
    %v1438 = vunpack.c.l.b16 %v1402
    %v1439 = vunpack.c.l.b16 %v1403
    %v1440 = vunpack.c.l.b16 %v1404
    %v1441 = vunpack.c.l.b16 %v1405
    %v1442 = vunpack.c.l.b16 %v1406
    %v1443 = vunpack.c.l.b16 %v1407
    %v1444 = vunpack.c.l.b16 %v1408
    %v1445 = vpack.c.b16 %v1430, %v1429
    %v1446 = vpack.c.b16 %v1432, %v1431
    %v1447 = vpack.c.b16 %v1434, %v1433
    %v1448 = vpack.c.b16 %v1436, %v1435
    %v1449 = vpack.c.b16 %v1438, %v1437
    %v1450 = vpack.c.b16 %v1440, %v1439
    %v1451 = vpack.c.b16 %v1442, %v1441
    %v1452 = vpack.c.b16 %v1444, %v1443
    %1461 = vmatpush.bf16.msra.mxu0 %v1452
    %1462 = vmatpush.bf16.msra.mxu0 %v1451
    %1463 = vmatpush.bf16.msra.mxu0 %v1450
    %1464 = vmatpush.bf16.msra.mxu0 %v1449
    %1465 = vmatpush.bf16.msra.mxu0 %v1448
    %1466 = vmatpush.bf16.msra.mxu0 %v1447
    %1467 = vmatpush.bf16.msra.mxu0 %v1446
    %1468 = vmatpush.bf16.msra.mxu0 %v1445
    %1469 = vmatmul.bf16.gmra.mxu0 %v1392
    %v1470 = vpop.f32.mrf.mxu0
    %v1471 = vadd.f32 %v1411, %v1470
    %v1472 = vpop.f32.mrf.mxu0
    %1473 = vdwg.mxu0
    %v1474 = vxor.u32 %v1471, 2147483648
    %v1475 = vmul.f32 %v1474, 1.442695
    %v1476 = vpow.pop %v1475
    %v1477 = vadd.f32 %v1476, 1.0
    %v1478 = vrcp.pop %v1477
    %v1479 = vmul.f32 %v1477, %v1478
    %v1480 = vsub.f32 1.0, %v1479
    %v1481 = vmul.f32 %v1478, %v1480
    %v1482 = vadd.f32 %v1478, %v1481
    %vm1483 = vweird.f32 %v1477
    %vm1484 = vweird.f32 %v1478
    %vm1485 = vmor %vm1483, %vm1484
    %v1486 = vsel %vm1485, %v1478, %v1482
    %v1487 = vand.u32 2147483647, %v1477
    %vm1488 = vcmp.eq.f32.partialorder %v1487, 8.507059e+37
    %v1489 = vand.u32 %v1477, 2147483648
    %v1490 = vor.u32 1.1754944e-38, %v1489
    %v1491 = vsel %vm1488, %v1490, %v1486
    %v1492 = vmul.f32 1.0, %v1491
    %1493 = vst [vmem:[#allocation7] sm:$0xff] %v1492
    // Predicated region
    $region34: #{tpu_custom_call.1} parent=1 // pred_check
      _
    $region35: #{tpu_custom_call.1} parent=1 // pred_check_branch
      %1495 = sbr.rel (0) target = $region37
    $region36: #{tpu_custom_call.1} parent=1 // pred_region
      %1497 = vsyncadd [#allocation4], 0
      %s1499 = sshll.u32 [#allocation7], 4
      %s1500 = int_to_ptr.vmem [resolvable:$true] %s1499
      %s1501 = sshll.u32 %s6, 4
      %s1502 = int_to_ptr.hbm [resolvable:$true] %s1501
      %1504 = dma.vmem_to_hbm [thread:$0]  %s1500, 128, %s1502, [#allocation4]
    $region37: #{tpu_custom_call.1} parent=1 // pred_fallthru
      _
    // Predicated region
    $region38: #{tpu_custom_call.1} parent=1 // pred_check
      _
    $region39: #{tpu_custom_call.1} parent=1 // pred_check_branch
      %1506 = sbr.rel (0) target = $region41
    $region40: #{tpu_custom_call.1} parent=1 // pred_region
      %1508 = dma.done [#allocation4], 128
    $region41: #{tpu_custom_call.1} parent=1 // pred_fallthru
      _
    %1509 = vsyncpa [#allocation3], 1
    %1510 = vsyncpa [#allocation6], 1
    %1511 = vsyncpa [#allocation4], 1

</llo_original>
